<compile_context>
chip_gen: v5e
topology: v5e:2x2
jax: 0.10.0
libtpu: 0.0.40
codegen_flags: <defaults>
</compile_context>

<pallas_src>
import functools

import jax
import jax.numpy as jnp
from jax.experimental import pallas as pl
from jax.experimental.pallas import tpu as pltpu


def _round_up(x: int, m: int) -> int:
    return ((x + m - 1) // m) * m


# ---------------- generation-aware VMEM budgets --------------------------------------
@functools.lru_cache(maxsize=None)
def _vmem_capacity_bytes() -> int:
    """Physical VMEM per TensorCore; conservative (v7x-safe) fallback if unknown."""
    try:
        cap = int(pltpu.get_tpu_info().vmem_capacity_bytes)
        if cap > 0:
            return cap
    except Exception:
        pass
    return 64 * 1024 * 1024  # v7x has the smallest VMEM (64 MiB/TC)


def _vmem_limit_bytes() -> int:
    # v7x (64 MiB) -> 48 MiB scoped limit; v5e/v6e (128 MiB) -> 96 MiB.
    return min((_vmem_capacity_bytes() * 3) // 4, 100 * 1024 * 1024)


def _weight_tile_target_bytes() -> int:
    # Per-buffer weight tile target; double-buffered this stays well under the limit.
    # v7x: ~19 MiB; v5e/v6e: 24 MiB.
    return min(24 * 1024 * 1024, (_vmem_capacity_bytes() * 3) // 10)


def _pick_tile_by_bytes(dim: int, bytes_per_col: int, target_bytes: int) -> int:
    """Largest multiple of 128 dividing `dim` whose column tile fits `target_bytes`."""
    best = None
    t = 128
    while t <= dim:
        if dim % t == 0 and t * bytes_per_col <= target_bytes:
            best = t
        t += 128
    if best is None:
        best = 128 if dim % 128 == 0 else dim
    return best


# ---------------- one-time weight preprocessing (NOT in the per-call path) ------------
def prepare_medusa_weights(w_medusa, b_medusa, w_lm, *, quantize_lm_head=True):
    """Layout + dtype + quantization prep done once at adapter-load time.

    w_medusa : (n_heads*H, H)  stacked per-head linear weight (PyTorch [out, in])
    b_medusa : (n_heads*H,)
    w_lm     : (V, H)          lm_head weight (no bias)

    Returns:
      w_fused_t : (H, n_heads*H) bf16     so that y = x @ w_fused_t
      b_fused   : (1, n_heads*H) f32
      w_lm_q    : (H, V_pad)     int8 (or bf16 if quantize_lm_head=False),
                  vocab zero-padded to a multiple of 128 only
      lm_scale  : (1, V_pad)     f32 per-column dequant scales (ones if not quantized)
    """
    n_out = w_medusa.shape[0]
    V, H = w_lm.shape
    assert H % 128 == 0, "hidden size must be a multiple of 128"

    w_fused_t = jnp.asarray(w_medusa, jnp.float32).T.astype(jnp.bfloat16)   # (H, n*H)
    b_fused = jnp.asarray(b_medusa, jnp.float32).reshape(1, n_out)          # (1, n*H)

    v_pad = _round_up(V, 128)
    w_lm_t = jnp.pad(jnp.asarray(w_lm, jnp.float32).T, ((0, 0), (0, v_pad - V)))

    if quantize_lm_head:
        absmax = jnp.max(jnp.abs(w_lm_t), axis=0, keepdims=True)            # (1, V_pad)
        lm_scale = jnp.where(absmax > 0.0, absmax / 127.0, 1.0).astype(jnp.float32)
        w_lm_q = jnp.clip(jnp.round(w_lm_t / lm_scale), -127.0, 127.0).astype(jnp.int8)
    else:
        lm_scale = jnp.ones((1, v_pad), jnp.float32)
        w_lm_q = w_lm_t.astype(jnp.bfloat16)
    return w_fused_t, b_fused, w_lm_q, lm_scale


# ---------------- Pallas kernel 1: fused medusa heads (residual + SiLU) ---------------
def _medusa_kernel(x_bf_ref, x_res_ref, w_ref, b_ref, o_ref):
    """Grid (n_heads * n_j,): step j covers fused output columns [j*tile_n,(j+1)*tile_n).
    Writes x_tile + SiLU(x @ W[:, tile] + b[tile]) in bf16."""
    y = jnp.dot(x_bf_ref[...], w_ref[...],
                preferred_element_type=jnp.float32) + b_ref[...]
    o_ref[...] = (x_res_ref[...].astype(jnp.float32) + y * jax.nn.sigmoid(y)
                  ).astype(o_ref.dtype)


def medusa_heads(x_bf, x_res, w_fused_t, b_fused):
    """x_bf:(B,H) bf16 MXU feed; x_res:(B,H) original-dtype residual;
    w_fused_t:(H,n_heads*H) bf16; b_fused:(1,n_heads*H) f32
    -> (B, n_heads*H) bf16, columns [h*H:(h+1)*H] = x + SiLU(x @ W_h^T + b_h)."""
    B, H = x_bf.shape
    n_out = w_fused_t.shape[1]
    assert n_out % H == 0

    # Byte-targeted bf16 weight tile; tile_n must divide H so each tile stays inside
    # one head's column range (residual x columns are then contiguous).
    tile_n = _pick_tile_by_bytes(H, H * 2, _weight_tile_target_bytes())
    n_j = H // tile_n
    n_steps = n_out // tile_n

    return pl.pallas_call(
        _medusa_kernel,
        out_shape=jax.ShapeDtypeStruct((B, n_out), jnp.bfloat16),
        grid_spec=pltpu.PrefetchScalarGridSpec(
            num_scalar_prefetch=0,
            grid=(n_steps,),
            in_specs=[
                pl.BlockSpec((B, H), lambda j: (0, 0)),            # x bf16, resident
                pl.BlockSpec((B, tile_n), lambda j: (0, j % n_j)),  # residual tile
                pl.BlockSpec((H, tile_n), lambda j: (0, j)),        # bf16 weight tile
                pl.BlockSpec((1, tile_n), lambda j: (0, j)),        # f32 bias tile
            ],
            out_specs=pl.BlockSpec((B, tile_n), lambda j: (0, j)),
        ),
        compiler_params=pltpu.CompilerParams(
            dimension_semantics=("parallel",),
            vmem_limit_bytes=_vmem_limit_bytes(),
        ),
    )(x_bf, x_res, w_fused_t, b_fused)


# ---------------- Pallas kernel 2: lm_head (quantized weight stream, two outputs) -----
def _lm_head_kernel(x_ref, spec_ref, wq_ref, scale_ref, logits_ref, spec_out_ref):
    """Per vocab tile: dequantize the int8 weight tile to bf16 (VPU, hidden behind the
    weight DMA), do two bf16 matmuls against the resident activations, apply the
    per-column scale to the f32 accumulators, and store both outputs lane-dense."""
    w = wq_ref[...].astype(jnp.bfloat16)          # int8 (or bf16) -> bf16 MXU feed
    s = scale_ref[...]                            # (1, tile_v) f32 per-column scales
    logits_ref[...] = (jnp.dot(x_ref[...], w, preferred_element_type=jnp.float32) * s
                       ).astype(logits_ref.dtype)
    spec_out_ref[...] = (jnp.dot(spec_ref[...], w, preferred_element_type=jnp.float32) * s
                         ).astype(spec_out_ref.dtype)


def lm_head_matmul(x_bf, spec2d, w_lm_q, lm_scale, *, out_dtype):
    """x_bf:(B,H) bf16; spec2d:(B*n_heads,H) bf16; w_lm_q:(H,V_pad) int8/bf16;
    lm_scale:(1,V_pad) f32 -> (logits (B,V_pad), spec_logits2d (B*n_heads,V_pad))."""
    B, H = x_bf.shape
    Bn = spec2d.shape[0]
    v_pad = w_lm_q.shape[1]
    w_bytes = w_lm_q.dtype.itemsize
    tile_v = _pick_tile_by_bytes(v_pad, H * w_bytes, _weight_tile_target_bytes())

    return pl.pallas_call(
        _lm_head_kernel,
        out_shape=(jax.ShapeDtypeStruct((B, v_pad), out_dtype),
                   jax.ShapeDtypeStruct((Bn, v_pad), out_dtype)),
        grid_spec=pltpu.PrefetchScalarGridSpec(
            num_scalar_prefetch=0,
            grid=(v_pad // tile_v,),
            in_specs=[
                # Constant block index -> the small activations are DMA'd to VMEM once
                # and stay resident across all vocab tiles.
                pl.BlockSpec((B, H), lambda j: (0, 0)),
                pl.BlockSpec((Bn, H), lambda j: (0, 0)),
                # int8 weight tiles streamed over the vocab (dominant HBM traffic).
                pl.BlockSpec((H, tile_v), lambda j: (0, j)),
                pl.BlockSpec((1, tile_v), lambda j: (0, j)),
            ],
            out_specs=[
                pl.BlockSpec((B, tile_v), lambda j: (0, j)),
                pl.BlockSpec((Bn, tile_v), lambda j: (0, j)),
            ],
        ),
        compiler_params=pltpu.CompilerParams(
            dimension_semantics=("parallel",),
            vmem_limit_bytes=_vmem_limit_bytes(),
        ),
    )(x_bf, spec2d, w_lm_q, lm_scale)


# ---------------- MedusaV2 forward (single device, no adapter segments) ---------------
def medusa_model_forward(x, w_fused_t, b_fused, w_lm_q, lm_scale, *, n_heads, vocab_size,
                         out_dtype=None):
    """x:(B,H) -> (logits (B,V), speculative_logits (B, n_heads, V))."""
    B, H = x.shape
    assert w_fused_t.shape == (H, n_heads * H)
    out_dtype = out_dtype if out_dtype is not None else x.dtype

    x_bf = x.astype(jnp.bfloat16)                                  # single bf16 cast
    spec_acts = medusa_heads(x_bf, x, w_fused_t, b_fused)          # (B, n_heads*H) bf16
    spec2d = spec_acts.reshape(B * n_heads, H)                     # free reshape

    logits_p, spec_p = lm_head_matmul(x_bf, spec2d, w_lm_q, lm_scale, out_dtype=out_dtype)
    v_pad = w_lm_q.shape[1]
    spec_p = spec_p.reshape(B, n_heads, v_pad)                     # free reshape
    if v_pad != vocab_size:
        # Only runs when V is not a multiple of 128 (rare for LLM vocabs); otherwise the
        # kernel outputs are returned as-is with no extra copy.
        logits_p = logits_p[:, :vocab_size]
        spec_p = spec_p[..., :vocab_size]
    return logits_p, spec_p


if __name__ == "__main__":
    # Small shapes consistent with the module: batch=4, hidden=256, 3 medusa heads,
    # vocab=1000 (not a multiple of 128 -> exercises the vocab-padding + slice path).
    B, H, V, N_HEADS = 4, 256, 1000, 3

    key = jax.random.PRNGKey(0)
    kx, kw, kb, kl = jax.random.split(key, 4)
    x = jax.random.normal(kx, (B, H), dtype=jnp.float32)
    w_medusa = jax.random.normal(kw, (N_HEADS * H, H), dtype=jnp.float32) * 0.02
    b_medusa = jax.random.normal(kb, (N_HEADS * H,), dtype=jnp.float32) * 0.02
    w_lm = jax.random.normal(kl, (V, H), dtype=jnp.float32) * 0.02

    # One-time weight preprocessing (layout + bf16 + int8 lm_head quantization).
    w_fused_t, b_fused, w_lm_q, lm_scale = prepare_medusa_weights(w_medusa, b_medusa, w_lm)

    fwd = jax.jit(functools.partial(medusa_model_forward, n_heads=N_HEADS, vocab_size=V))
    logits, spec_logits = fwd(x, w_fused_t, b_fused, w_lm_q, lm_scale)
    jax.block_until_ready((logits, spec_logits))

    # Pure-JAX reference mirroring the kernel math: bf16 MXU feeds, f32 accumulation,
    # f32 residual add, bf16 stacked activations, int8 per-column-quantized lm_head.
    x_bf = x.astype(jnp.bfloat16)
    y_ref = jnp.dot(x_bf, w_medusa.astype(jnp.bfloat16).T,
                    preferred_element_type=jnp.float32) + b_medusa
    silu_ref = y_ref * jax.nn.sigmoid(y_ref)
    out_res = x[:, None, :] + silu_ref.reshape(B, N_HEADS, H)
    stacked_ref = jnp.concatenate([x[:, None, :], out_res], axis=1).astype(jnp.bfloat16)
    logits_all_ref = (jnp.dot(stacked_ref.reshape(B * (N_HEADS + 1), H),
                              w_lm_q.astype(jnp.bfloat16),
                              preferred_element_type=jnp.float32) * lm_scale)
    logits_all_ref = logits_all_ref[:, :V].reshape(B, N_HEADS + 1, V)

    assert logits.shape == (B, V)
    assert spec_logits.shape == (B, N_HEADS, V)
    assert jnp.allclose(logits, logits_all_ref[:, 0, :].astype(logits.dtype),
                        atol=1e-2, rtol=1e-2)
    assert jnp.allclose(spec_logits, logits_all_ref[:, 1:, :].astype(spec_logits.dtype),
                        atol=1e-2, rtol=1e-2)

    print("KERNEL_OK")
</pallas_src>

<mosaic_0001>
module attributes {stable_mosaic.version = 11 : i64} {
  func.func @_lm_head_kernel(%arg0: i32, %arg1: memref<4x256xbf16, #tpu.memory_space<vmem>>, %arg2: memref<12x256xbf16, #tpu.memory_space<vmem>>, %arg3: memref<256x1024xi8, #tpu.memory_space<vmem>>, %arg4: memref<1x1024xf32, #tpu.memory_space<vmem>>, %arg5: memref<4x1024xf32, #tpu.memory_space<vmem>>, %arg6: memref<12x1024xf32, #tpu.memory_space<vmem>>) attributes {dimension_semantics = [#tpu.dimension_semantics<parallel>], iteration_bounds = array<i64: 1>, scalar_prefetch = 0 : i64, scratch_operands = 0 : i64, tpu.core_type = #tpu.core_type<tc>, window_params = [{pipeline_mode = #tpu.pipeline_mode<synchronous>, transform_indices = @transform_0, window_bounds = array<i64: 4, 256>}, {pipeline_mode = #tpu.pipeline_mode<synchronous>, transform_indices = @transform_1, window_bounds = array<i64: 12, 256>}, {transform_indices = @transform_2, window_bounds = array<i64: 256, 1024>}, {transform_indices = @transform_3, window_bounds = array<i64: 1, 1024>}, {transform_indices = @transform_4, window_bounds = array<i64: 4, 1024>}, {transform_indices = @transform_5, window_bounds = array<i64: 12, 1024>}]} {
    %c0 = arith.constant 0 : index
    %c0_0 = arith.constant 0 : index
    %0 = vector.load %arg3[%c0, %c0_0] : memref<256x1024xi8, #tpu.memory_space<vmem>>, vector<256x1024xi8>
    %1 = arith.sitofp %0 : vector<256x1024xi8> to vector<256x1024xbf16>
    %c0_1 = arith.constant 0 : index
    %c0_2 = arith.constant 0 : index
    %2 = vector.load %arg4[%c0_1, %c0_2] : memref<1x1024xf32, #tpu.memory_space<vmem>>, vector<1x1024xf32>
    %c0_3 = arith.constant 0 : index
    %c0_4 = arith.constant 0 : index
    %3 = vector.load %arg1[%c0_3, %c0_4] : memref<4x256xbf16, #tpu.memory_space<vmem>>, vector<4x256xbf16>
    %cst = arith.constant dense<0.000000e+00> : vector<4x1024xf32>
    %4 = tpu.matmul %3, %1, %cst {dimension_numbers = #tpu.dot_dimension_numbers<[1], [0], [0], [1], [0, 0, 1, 1], [], []>} : vector<4x256xbf16>, vector<256x1024xbf16>, vector<4x1024xf32> -> vector<4x1024xf32>
    %5 = vector.broadcast %2 : vector<1x1024xf32> to vector<4x1024xf32>
    %6 = arith.mulf %4, %5 : vector<4x1024xf32>
    %c0_5 = arith.constant 0 : index
    %c0_6 = arith.constant 0 : index
    %7 = vector.load %arg5[%c0_5, %c0_6] : memref<4x1024xf32, #tpu.memory_space<vmem>>, vector<4x1024xf32>
    tpu.vector_store %arg5[%c0_5, %c0_6], %6 {strides = array<i32>} : memref<4x1024xf32, #tpu.memory_space<vmem>>, vector<4x1024xf32>,
    %c0_7 = arith.constant 0 : index
    %c0_8 = arith.constant 0 : index
    %8 = vector.load %arg2[%c0_7, %c0_8] : memref<12x256xbf16, #tpu.memory_space<vmem>>, vector<12x256xbf16>
    %cst_9 = arith.constant dense<0.000000e+00> : vector<12x1024xf32>
    %9 = tpu.matmul %8, %1, %cst_9 {dimension_numbers = #tpu.dot_dimension_numbers<[1], [0], [0], [1], [0, 0, 1, 1], [], []>} : vector<12x256xbf16>, vector<256x1024xbf16>, vector<12x1024xf32> -> vector<12x1024xf32>
    %10 = vector.broadcast %2 : vector<1x1024xf32> to vector<12x1024xf32>
    %11 = arith.mulf %9, %10 : vector<12x1024xf32>
    %c0_10 = arith.constant 0 : index
    %c0_11 = arith.constant 0 : index
    %12 = vector.load %arg6[%c0_10, %c0_11] : memref<12x1024xf32, #tpu.memory_space<vmem>>, vector<12x1024xf32>
    tpu.vector_store %arg6[%c0_10, %c0_11], %11 {strides = array<i32>} : memref<12x1024xf32, #tpu.memory_space<vmem>>, vector<12x1024xf32>,
    return
  }
  func.func @transform_0(%arg0: i32) -> (i32, i32) {
    %c0_i32 = arith.constant 0 : i32
    %c0_i32_0 = arith.constant 0 : i32
    %c0_i32_1 = arith.constant 0 : i32
    return %c0_i32, %c0_i32_0 : i32, i32
  }
  func.func @transform_1(%arg0: i32) -> (i32, i32) {
    %c0_i32 = arith.constant 0 : i32
    %c0_i32_0 = arith.constant 0 : i32
    %c0_i32_1 = arith.constant 0 : i32
    return %c0_i32, %c0_i32_0 : i32, i32
  }
  func.func @transform_2(%arg0: i32) -> (i32, i32) {
    %c0_i32 = arith.constant 0 : i32
    %c0_i32_0 = arith.constant 0 : i32
    return %c0_i32, %arg0 : i32, i32
  }
  func.func @transform_3(%arg0: i32) -> (i32, i32) {
    %c0_i32 = arith.constant 0 : i32
    %c0_i32_0 = arith.constant 0 : i32
    return %c0_i32, %arg0 : i32, i32
  }
  func.func @transform_4(%arg0: i32) -> (i32, i32) {
    %c0_i32 = arith.constant 0 : i32
    %c0_i32_0 = arith.constant 0 : i32
    return %c0_i32, %arg0 : i32, i32
  }
  func.func @transform_5(%arg0: i32) -> (i32, i32) {
    %c0_i32 = arith.constant 0 : i32
    %c0_i32_0 = arith.constant 0 : i32
    return %c0_i32, %arg0 : i32, i32
  }
}

module attributes {stable_mosaic.version = 11 : i64} {
  func.func @_medusa_kernel(%arg0: i32, %arg1: memref<4x256xbf16, #tpu.memory_space<vmem>>, %arg2: memref<4x256xf32, #tpu.memory_space<vmem>>, %arg3: memref<256x256xbf16, #tpu.memory_space<vmem>>, %arg4: memref<1x256xf32, #tpu.memory_space<vmem>>, %arg5: memref<4x256xbf16, #tpu.memory_space<vmem>>) attributes {dimension_semantics = [#tpu.dimension_semantics<parallel>], iteration_bounds = array<i64: 3>, scalar_prefetch = 0 : i64, scratch_operands = 0 : i64, tpu.core_type = #tpu.core_type<tc>, window_params = [{pipeline_mode = #tpu.pipeline_mode<synchronous>, transform_indices = @transform_0, window_bounds = array<i64: 4, 256>}, {transform_indices = @transform_1, window_bounds = array<i64: 4, 256>}, {transform_indices = @transform_2, window_bounds = array<i64: 256, 256>}, {transform_indices = @transform_3, window_bounds = array<i64: 1, 256>}, {transform_indices = @transform_4, window_bounds = array<i64: 4, 256>}]} {
    %c0 = arith.constant 0 : index
    %c0_0 = arith.constant 0 : index
    %0 = vector.load %arg1[%c0, %c0_0] : memref<4x256xbf16, #tpu.memory_space<vmem>>, vector<4x256xbf16>
    %c0_1 = arith.constant 0 : index
    %c0_2 = arith.constant 0 : index
    %1 = vector.load %arg3[%c0_1, %c0_2] : memref<256x256xbf16, #tpu.memory_space<vmem>>, vector<256x256xbf16>
    %cst = arith.constant dense<0.000000e+00> : vector<4x256xf32>
    %2 = tpu.matmul %0, %1, %cst {dimension_numbers = #tpu.dot_dimension_numbers<[1], [0], [0], [1], [0, 0, 1, 1], [], []>} : vector<4x256xbf16>, vector<256x256xbf16>, vector<4x256xf32> -> vector<4x256xf32>
    %c0_3 = arith.constant 0 : index
    %c0_4 = arith.constant 0 : index
    %3 = vector.load %arg4[%c0_3, %c0_4] : memref<1x256xf32, #tpu.memory_space<vmem>>, vector<1x256xf32>
    %4 = vector.broadcast %3 : vector<1x256xf32> to vector<4x256xf32>
    %5 = arith.addf %2, %4 : vector<4x256xf32>
    %c0_5 = arith.constant 0 : index
    %c0_6 = arith.constant 0 : index
    %6 = vector.load %arg2[%c0_5, %c0_6] : memref<4x256xf32, #tpu.memory_space<vmem>>, vector<4x256xf32>
    %7 = arith.negf %5 : vector<4x256xf32>
    %8 = math.exp %7 : vector<4x256xf32>
    %cst_7 = arith.constant 1.000000e+00 : f32
    %9 = vector.broadcast %cst_7 : f32 to vector<4x256xf32>
    %10 = arith.addf %9, %8 : vector<4x256xf32>
    %11 = arith.divf %9, %10 : vector<4x256xf32>
    %12 = arith.mulf %5, %11 : vector<4x256xf32>
    %13 = arith.addf %6, %12 : vector<4x256xf32>
    %14 = arith.truncf %13 : vector<4x256xf32> to vector<4x256xbf16>
    %c0_8 = arith.constant 0 : index
    %c0_9 = arith.constant 0 : index
    %15 = vector.load %arg5[%c0_8, %c0_9] : memref<4x256xbf16, #tpu.memory_space<vmem>>, vector<4x256xbf16>
    tpu.vector_store %arg5[%c0_8, %c0_9], %14 {strides = array<i32>} : memref<4x256xbf16, #tpu.memory_space<vmem>>, vector<4x256xbf16>,
    return
  }
  func.func @transform_0(%arg0: i32) -> (i32, i32) {
    %c0_i32 = arith.constant 0 : i32
    %c0_i32_0 = arith.constant 0 : i32
    %c0_i32_1 = arith.constant 0 : i32
    return %c0_i32, %c0_i32_0 : i32, i32
  }
  func.func @transform_1(%arg0: i32) -> (i32, i32) {
    %c1_i32 = arith.constant 1 : i32
    %c0_i32 = arith.constant 0 : i32
    %0 = arith.cmpi eq, %c1_i32, %c0_i32 : i32
    %c1_i32_0 = arith.constant 1 : i32
    %1 = arith.select %0, %c1_i32_0, %c1_i32 : i32
    %2 = arith.remsi %arg0, %1 : i32
    %c0_i32_1 = arith.constant 0 : i32
    %3 = arith.cmpi ne, %2, %c0_i32_1 : i32
    %c0_i32_2 = arith.constant 0 : i32
    %4 = arith.cmpi slt, %2, %c0_i32_2 : i32
    %c0_i32_3 = arith.constant 0 : i32
    %5 = arith.cmpi slt, %1, %c0_i32_3 : i32
    %6 = arith.xori %4, %5 : i1
    %7 = arith.andi %6, %3 : i1
    %8 = arith.addi %2, %1 : i32
    %9 = arith.select %7, %8, %2 : i32
    %c0_i32_4 = arith.constant 0 : i32
    %c0_i32_5 = arith.constant 0 : i32
    return %c0_i32_4, %9 : i32, i32
  }
  func.func @transform_2(%arg0: i32) -> (i32, i32) {
    %c0_i32 = arith.constant 0 : i32
    %c0_i32_0 = arith.constant 0 : i32
    return %c0_i32, %arg0 : i32, i32
  }
  func.func @transform_3(%arg0: i32) -> (i32, i32) {
    %c0_i32 = arith.constant 0 : i32
    %c0_i32_0 = arith.constant 0 : i32
    return %c0_i32, %arg0 : i32, i32
  }
  func.func @transform_4(%arg0: i32) -> (i32, i32) {
    %c0_i32 = arith.constant 0 : i32
    %c0_i32_0 = arith.constant 0 : i32
    return %c0_i32, %arg0 : i32, i32
  }
}

</mosaic_0001>

<llo_original>
// kernel: medusa_model_forward.2
$region0: #{medusa_model_forward.2}
  #allocation0 [shape = 'u32[]', space=smem, size = 0x4, offset = 0x4, fixed_abs, tag = 'smem constant byte address 0x4 - core index']
  #allocation1 [shape = 'u32[72,128]{1,0:T(1,128)}', space=vmem, size = 0x9000, scoped, tag = 'internal scratch']
  %s0 = inlined_call_operand.vmem [shape: bf16[4,256], index: 0, kind: input, shape index: {}]
  %s1 = inlined_call_operand.vmem [shape: f32[4,256], index: 1, kind: input, shape index: {}]
  %s2 = inlined_call_operand.hbm [shape: bf16[256,768], index: 2, kind: input, shape index: {}]
  %s3 = inlined_call_operand.vmem [shape: f32[1,768], index: 3, kind: input, shape index: {}]
  %s4 = inlined_call_operand.vmem [shape: bf16[4,768], index: 4, kind: output, shape index: {}]
  %s5 = sld [smem:[#allocation0]]
  $region53: #{medusa_model_forward.2} parent=0
    _
  %s7 = ssub.s32 1, %s5
  %s8 = scalar_select 0, %s7, %s5
  $region1: #{medusa_model_forward.2} parent=0
    #allocation2 [shape = 'u8[262144]{0}', space=vmem, size = 0x40000, scoped, tag = 'input window, operand 2']
    #allocation3 [shape = 's32[2]{0}', space=sflag, size = 0x8, scoped, tag = 'scoped memory for medusa_model_forward.2']
    %9 = vsyncpa [#allocation3], 0
    %s10 = scalar_lea.sflag [#allocation3], 1
    %11 = vsyncpa %s10, 0
    loop: start=0, step=1, limit=5
    $region2: #{medusa_model_forward.2} parent=1 // loop_pre_header
      _
    $region3: #{medusa_model_forward.2} parent=1 // loop_header
      %s13 = sphi 0, %s17
      %p14 = scmp.ge.s32.totalorder %s13, 5
      %s21 = sphi 0, %s21
      %s23 = sphi 0, %s21
      %s24 = sphi 0, %s23
      %s38 = sphi 0, %s24
      %s42 = sphi 0, %s42
      %s44 = sphi 0, %s42
      %s45 = sphi 0, %s44
      %s59 = sphi 0, %s45
      %s65 = sphi 0, %s67
      %s68 = sphi 0, %s65
      %s69 = sphi 0, %s68
      %s85 = sphi 0, %s69
      %s91 = sphi 0, %s93
      %s94 = sphi 0, %s91
      %s95 = sphi 0, %s94
      %s111 = sphi 0, %s95
      %s117 = sphi 0, %s119
      %s120 = sphi 0, %s117
      %s121 = sphi 0, %s120
      %s137 = sphi 0, %s121
    $region4: #{medusa_model_forward.2} parent=1 // loop_header_branch
      %16 = sbr.rel (%p14) target = $region8
    $region5: #{medusa_model_forward.2} parent=1 // loop_body
      %s18 = ssub.s32 %s13, 1
      %s19 = ssub.s32 %s13, 2
      %s20 = sadd.s32 %s13, 1
      %s22 = sadd.s32 %s21, 1
      %p25 = scmp.eq.s32.totalorder %s13, 2
      %p26 = scmp.ne.s32.totalorder %s21, %s23
      %p27 = scmp.eq.s32.totalorder %s13, 0
      %p28 = por %p26, %p27
      %p29 = scmp.ne.s32.totalorder %s21, %s23
      %p30 = scmp.eq.s32.totalorder %s18, 2
      %p31 = por %p29, %p30
      %p32 = scmp.ne.s32.totalorder %s23, %s24
      %p33 = scmp.eq.s32.totalorder %s18, 0
      %p34 = por %p32, %p33
      %p35 = scmp.ne.s32.totalorder %s23, %s24
      %p36 = scmp.eq.s32.totalorder %s19, 2
      %p37 = por %p35, %p36
      %p39 = scmp.ne.s32.totalorder %s24, %s38
      %p40 = scmp.eq.s32.totalorder %s19, 0
      %p41 = por %p39, %p40
      %s43 = sadd.s32 %s42, 1
      %p46 = scmp.eq.s32.totalorder %s13, 2
      %p47 = scmp.ne.s32.totalorder %s42, %s44
      %p48 = scmp.eq.s32.totalorder %s13, 0
      %p49 = por %p47, %p48
      %p50 = scmp.ne.s32.totalorder %s42, %s44
      %p51 = scmp.eq.s32.totalorder %s18, 2
      %p52 = por %p50, %p51
      %p53 = scmp.ne.s32.totalorder %s44, %s45
      %p54 = scmp.eq.s32.totalorder %s18, 0
      %p55 = por %p53, %p54
      %p56 = scmp.ne.s32.totalorder %s44, %s45
      %p57 = scmp.eq.s32.totalorder %s19, 2
      %p58 = por %p56, %p57
      %p60 = scmp.ne.s32.totalorder %s45, %s59
      %p61 = scmp.eq.s32.totalorder %s19, 0
      %p62 = por %p60, %p61
      %s63 = ssub.s32 %s13, %s20
      %p64 = scmp.eq.s32.totalorder %s63, 0
      %s66 = sadd.s32 %s65, 1
      %s67 = scalar_select %p64, %s65, %s66
      %p70 = pneg %p64
      %p71 = scmp.eq.s32.totalorder %s13, 2
      %p72 = por %p70, %p71
      %p73 = scmp.ne.s32.totalorder %s65, %s68
      %p74 = scmp.eq.s32.totalorder %s13, 0
      %p75 = por %p73, %p74
      %p76 = scmp.ne.s32.totalorder %s65, %s68
      %p77 = scmp.eq.s32.totalorder %s18, 2
      %p78 = por %p76, %p77
      %p79 = scmp.ne.s32.totalorder %s68, %s69
      %p80 = scmp.eq.s32.totalorder %s18, 0
      %p81 = por %p79, %p80
      %p82 = scmp.ne.s32.totalorder %s68, %s69
      %p83 = scmp.eq.s32.totalorder %s19, 2
      %p84 = por %p82, %p83
      %p86 = scmp.ne.s32.totalorder %s69, %s85
      %p87 = scmp.eq.s32.totalorder %s19, 0
      %p88 = por %p86, %p87
      %s89 = ssub.s32 %s13, %s20
      %p90 = scmp.eq.s32.totalorder %s89, 0
      %s92 = sadd.s32 %s91, 1
      %s93 = scalar_select %p90, %s91, %s92
      %p96 = pneg %p90
      %p97 = scmp.eq.s32.totalorder %s13, 2
      %p98 = por %p96, %p97
      %p99 = scmp.ne.s32.totalorder %s91, %s94
      %p100 = scmp.eq.s32.totalorder %s13, 0
      %p101 = por %p99, %p100
      %p102 = scmp.ne.s32.totalorder %s91, %s94
      %p103 = scmp.eq.s32.totalorder %s18, 2
      %p104 = por %p102, %p103
      %p105 = scmp.ne.s32.totalorder %s94, %s95
      %p106 = scmp.eq.s32.totalorder %s18, 0
      %p107 = por %p105, %p106
      %p108 = scmp.ne.s32.totalorder %s94, %s95
      %p109 = scmp.eq.s32.totalorder %s19, 2
      %p110 = por %p108, %p109
      %p112 = scmp.ne.s32.totalorder %s95, %s111
      %p113 = scmp.eq.s32.totalorder %s19, 0
      %p114 = por %p112, %p113
      %s115 = ssub.s32 %s13, %s20
      %p116 = scmp.eq.s32.totalorder %s115, 0
      %s118 = sadd.s32 %s117, 1
      %s119 = scalar_select %p116, %s117, %s118
      %p122 = pneg %p116
      %p123 = scmp.eq.s32.totalorder %s13, 2
      %p124 = por %p122, %p123
      %p125 = scmp.ne.s32.totalorder %s117, %s120
      %p126 = scmp.eq.s32.totalorder %s13, 0
      %p127 = por %p125, %p126
      %p128 = scmp.ne.s32.totalorder %s117, %s120
      %p129 = scmp.eq.s32.totalorder %s18, 2
      %p130 = por %p128, %p129
      %p131 = scmp.ne.s32.totalorder %s120, %s121
      %p132 = scmp.eq.s32.totalorder %s18, 0
      %p133 = por %p131, %p132
      %p134 = scmp.ne.s32.totalorder %s120, %s121
      %p135 = scmp.eq.s32.totalorder %s19, 2
      %p136 = por %p134, %p135
      %p138 = scmp.ne.s32.totalorder %s121, %s137
      %p139 = scmp.eq.s32.totalorder %s19, 0
      %p140 = por %p138, %p139
      %p141 = scmp.le.s32.totalorder 1, %s13
      %p142 = scmp.lt.s32.totalorder %s13, 4
      %p143 = pnand %p141, %p142
      %p144 = pneg %p143
      // Predicated region
      $region9: #{medusa_model_forward.2} parent=5 // pred_check
        _
      $region10: #{medusa_model_forward.2} parent=5 // pred_check_branch
        %146 = sbr.rel (%p143) target = $region12
      $region11: #{medusa_model_forward.2} parent=5 // pred_region
        %s147 = ssub.s32 %s13, 1
        // Predicated region
        $region13: #{medusa_model_forward.2} parent=11 // pred_check
          %p148 = pneg %p34
        $region14: #{medusa_model_forward.2} parent=11 // pred_check_branch
          %150 = sbr.rel (%p148) target = $region16
        $region15: #{medusa_model_forward.2} parent=11 // pred_region
          _
        $region16: #{medusa_model_forward.2} parent=11 // pred_fallthru
          _
        // Predicated region
        $region17: #{medusa_model_forward.2} parent=11 // pred_check
          %p151 = pneg %p55
        $region18: #{medusa_model_forward.2} parent=11 // pred_check_branch
          %153 = sbr.rel (%p151) target = $region20
        $region19: #{medusa_model_forward.2} parent=11 // pred_region
          _
        $region20: #{medusa_model_forward.2} parent=11 // pred_fallthru
          _
      $region12: #{medusa_model_forward.2} parent=5 // pred_fallthru
        _
      %p154 = scmp.lt.s32.totalorder %s13, 3
      // Predicated region
      $region21: #{medusa_model_forward.2} parent=5 // pred_check
        %p155 = pneg %p154
      $region22: #{medusa_model_forward.2} parent=5 // pred_check_branch
        %157 = sbr.rel (%p155) target = $region24
      $region23: #{medusa_model_forward.2} parent=5 // pred_region
        // Predicated region
        $region25: #{medusa_model_forward.2} parent=23 // pred_check
          %p158 = pneg %p75
        $region26: #{medusa_model_forward.2} parent=23 // pred_check_branch
          %160 = sbr.rel (%p158) target = $region28
        $region27: #{medusa_model_forward.2} parent=23 // pred_region
          %s161 = sand.u32 %s65, 1
          %s162 = scalar_lea.sflag [#allocation3], %s161
          %s163 = sand.u32 %s65, 1
          %s164 = smul.addr %s163, 256
          %s165 = scalar_lea.vmem [#allocation2], %s164
          %s166 = smul.u32 2, %s13
          %168 = vsyncadd %s162, 0
          %s169 = smul.addr %s166, 4
          %s170 = scalar_lea.hbm %s2, %s169
          %s171 = sshll.u32 %s170, 4
          %s172 = int_to_ptr.hbm [resolvable:$true] %s171
          %s173 = sshll.u32 %s165, 4
          %s174 = int_to_ptr.vmem [resolvable:$true] %s173
          %179 = dma.hbm_to_vmem [thread:$0]  %s172, 4096, %s174, %s162, 384, 128, 8
        $region28: #{medusa_model_forward.2} parent=23 // pred_fallthru
          _
        // Predicated region
        $region29: #{medusa_model_forward.2} parent=23 // pred_check
          %p180 = pneg %p101
        $region30: #{medusa_model_forward.2} parent=23 // pred_check_branch
          %182 = sbr.rel (%p180) target = $region32
        $region31: #{medusa_model_forward.2} parent=23 // pred_region
          %s183 = smul.u32 2, %s13
          %p184 = scmp.lt.s32.totalorder %s183, 5
          %s185 = scalar_select %p184, %s183, 5
          %s186 = scalar_lea.vmem %s3, %s185
          %s187 = smul.u32 2, %s13
        $region32: #{medusa_model_forward.2} parent=23 // pred_fallthru
          _
      $region24: #{medusa_model_forward.2} parent=5 // pred_fallthru
        _
      %p188 = scmp.le.s32.totalorder 1, %s13
      %p189 = scmp.lt.s32.totalorder %s13, 4
      %p190 = pnand %p188, %p189
      %p191 = pneg %p190
      // Predicated region
      $region33: #{medusa_model_forward.2} parent=5 // pred_check
        _
      $region34: #{medusa_model_forward.2} parent=5 // pred_check_branch
        %193 = sbr.rel (%p190) target = $region36
      $region35: #{medusa_model_forward.2} parent=5 // pred_region
        %s194 = ssub.s32 %s13, 1
        %s195 = sand.u32 %s68, 1
        %s196 = scalar_lea.sflag [#allocation3], %s195
        %s197 = sand.u32 %s68, 1
        %s198 = smul.addr %s197, 256
        %s199 = scalar_lea.vmem [#allocation2], %s198
        // Predicated region
        $region37: #{medusa_model_forward.2} parent=35 // pred_check
          %p200 = pneg %p81
        $region38: #{medusa_model_forward.2} parent=35 // pred_check_branch
          %202 = sbr.rel (%p200) target = $region40
        $region39: #{medusa_model_forward.2} parent=35 // pred_region
          %204 = dma.done %s196, 4096
        $region40: #{medusa_model_forward.2} parent=35 // pred_fallthru
          _
        %p205 = pneg %p34
        %p206 = pneg %p31
        %p207 = pneg %p55
        %p208 = pneg %p52
        %s209 = sand.u32 %s68, 1
        %s210 = scalar_lea.sflag [#allocation3], %s209
        %s211 = sand.u32 %s68, 1
        %s212 = smul.addr %s211, 256
        %s213 = scalar_lea.vmem [#allocation2], %s212
        %p214 = pneg %p81
        %p215 = pneg %p78
        %s216 = smul.u32 2, %s18
        %p217 = scmp.lt.s32.totalorder %s216, 5
        %s218 = scalar_select %p217, %s216, 5
        %s219 = scalar_lea.vmem %s3, %s218
        %p220 = pneg %p107
        %p221 = pneg %p104
        %p222 = pneg %p133
        %p223 = pneg %p130
        %s224 = smul.u32 2, %s18
        %p225 = scmp.lt.s32.totalorder %s224, 5
        %s226 = scalar_select %p225, %s224, 5
        %s227 = smul.addr %s226, 2
        %s228 = scalar_lea.vmem %s4, %s227
        %s229 = smul.u32 2, %s18
        %s230 = smul.u32 2, %s18
        %p231 = scmp.lt.s32.totalorder %s230, 5
        %s232 = scalar_select %p231, %s230, 5
        %s233 = scalar_lea.vmem %s3, %s232
        %s234 = smul.u32 2, %s18
        %s235 = smul.u32 2, %s18
        %p236 = scmp.lt.s32.totalorder %s235, 5
        %s237 = scalar_select %p236, %s235, 5
        %s238 = smul.addr %s237, 2
        %s239 = scalar_lea.vmem %s4, %s238
        %s240 = smul.u32 2, %s18
        %v241 = vld [vmem:[%s0] sm:$0xf]
        %v242 = vld [vmem:[%s199] sm:$0xff]
        %v243 = vld [vmem:[%s199 + $0x8] sm:$0xff]
        %v244 = vld [vmem:[%s199 + $0x10] sm:$0xff]
        %v245 = vld [vmem:[%s199 + $0x18] sm:$0xff]
        %v246 = vld [vmem:[%s199 + $0x20] sm:$0xff]
        %v247 = vld [vmem:[%s199 + $0x28] sm:$0xff]
        %v248 = vld [vmem:[%s199 + $0x30] sm:$0xff]
        %v249 = vld [vmem:[%s199 + $0x38] sm:$0xff]
        %v250 = vld [vmem:[%s199 + $0x40] sm:$0xff]
        %v251 = vld [vmem:[%s199 + $0x48] sm:$0xff]
        %v252 = vld [vmem:[%s199 + $0x50] sm:$0xff]
        %v253 = vld [vmem:[%s199 + $0x58] sm:$0xff]
        %v254 = vld [vmem:[%s199 + $0x60] sm:$0xff]
        %v255 = vld [vmem:[%s199 + $0x68] sm:$0xff]
        %v256 = vld [vmem:[%s199 + $0x70] sm:$0xff]
        %v257 = vld [vmem:[%s199 + $0x78] sm:$0xff]
        %v258 = vld [vmem:[%s199 + $0x80] sm:$0xff]
        %v259 = vld [vmem:[%s199 + $0x88] sm:$0xff]
        %v260 = vld [vmem:[%s199 + $0x90] sm:$0xff]
        %v261 = vld [vmem:[%s199 + $0x98] sm:$0xff]
        %v262 = vld [vmem:[%s199 + $0xa0] sm:$0xff]
        %v263 = vld [vmem:[%s199 + $0xa8] sm:$0xff]
        %v264 = vld [vmem:[%s199 + $0xb0] sm:$0xff]
        %v265 = vld [vmem:[%s199 + $0xb8] sm:$0xff]
        %v266 = vld [vmem:[%s199 + $0xc0] sm:$0xff]
        %v267 = vld [vmem:[%s199 + $0xc8] sm:$0xff]
        %v268 = vld [vmem:[%s199 + $0xd0] sm:$0xff]
        %v269 = vld [vmem:[%s199 + $0xd8] sm:$0xff]
        %v270 = vld [vmem:[%s199 + $0xe0] sm:$0xff]
        %v271 = vld [vmem:[%s199 + $0xe8] sm:$0xff]
        %v272 = vld [vmem:[%s199 + $0xf0] sm:$0xff]
        %v273 = vld [vmem:[%s199 + $0xf8] sm:$0xff]
        %v274 = vld [vmem:[%s233] sm:$0x3]
        %v276 = vperm.slane %v274, 0
        %v277 = vperm.slane %v274, 1
        %281 = vst [vmem:[#allocation1] ss:$4 sm:$0xff] %v241
        %v282 = vld.sshfl [vmem:[#allocation1] sm:$0xff pattern:$0x73625140]
        %v283 = vld.sshfl [vmem:[#allocation1 + $0x8] sm:$0xff pattern:$0x73625140]
        %v318 = vunpack.c.l.b16 %v242
        %v319 = vunpack.c.h.b16 %v242
        %v320 = vunpack.c.l.b16 %v243
        %v321 = vunpack.c.h.b16 %v243
        %v322 = vunpack.c.l.b16 %v244
        %v323 = vunpack.c.h.b16 %v244
        %v324 = vunpack.c.l.b16 %v245
        %v325 = vunpack.c.h.b16 %v245
        %v326 = vunpack.c.l.b16 %v246
        %v327 = vunpack.c.h.b16 %v246
        %v328 = vunpack.c.l.b16 %v247
        %v329 = vunpack.c.h.b16 %v247
        %v330 = vunpack.c.l.b16 %v248
        %v331 = vunpack.c.h.b16 %v248
        %v332 = vunpack.c.l.b16 %v249
        %v333 = vunpack.c.h.b16 %v249
        %v334 = vunpack.c.l.b16 %v250
        %v335 = vunpack.c.h.b16 %v250
        %v336 = vunpack.c.l.b16 %v251
        %v337 = vunpack.c.h.b16 %v251
        %v338 = vunpack.c.l.b16 %v252
        %v339 = vunpack.c.h.b16 %v252
        %v340 = vunpack.c.l.b16 %v253
        %v341 = vunpack.c.h.b16 %v253
        %v342 = vunpack.c.l.b16 %v254
        %v343 = vunpack.c.h.b16 %v254
        %v344 = vunpack.c.l.b16 %v255
        %v345 = vunpack.c.h.b16 %v255
        %v346 = vunpack.c.l.b16 %v256
        %v347 = vunpack.c.h.b16 %v256
        %v348 = vunpack.c.l.b16 %v257
        %v349 = vunpack.c.h.b16 %v257
        %v350 = vunpack.c.l.b16 %v258
        %v351 = vunpack.c.h.b16 %v258
        %v352 = vunpack.c.l.b16 %v259
        %v353 = vunpack.c.h.b16 %v259
        %v354 = vunpack.c.l.b16 %v260
        %v355 = vunpack.c.h.b16 %v260
        %v356 = vunpack.c.l.b16 %v261
        %v357 = vunpack.c.h.b16 %v261
        %v358 = vunpack.c.l.b16 %v262
        %v359 = vunpack.c.h.b16 %v262
        %v360 = vunpack.c.l.b16 %v263
        %v361 = vunpack.c.h.b16 %v263
        %v362 = vunpack.c.l.b16 %v264
        %v363 = vunpack.c.h.b16 %v264
        %v364 = vunpack.c.l.b16 %v265
        %v365 = vunpack.c.h.b16 %v265
        %v366 = vunpack.c.l.b16 %v266
        %v367 = vunpack.c.h.b16 %v266
        %v368 = vunpack.c.l.b16 %v267
        %v369 = vunpack.c.h.b16 %v267
        %v370 = vunpack.c.l.b16 %v268
        %v371 = vunpack.c.h.b16 %v268
        %v372 = vunpack.c.l.b16 %v269
        %v373 = vunpack.c.h.b16 %v269
        %v374 = vunpack.c.l.b16 %v270
        %v375 = vunpack.c.h.b16 %v270
        %v376 = vunpack.c.l.b16 %v271
        %v377 = vunpack.c.h.b16 %v271
        %v378 = vunpack.c.l.b16 %v272
        %v379 = vunpack.c.h.b16 %v272
        %v380 = vunpack.c.l.b16 %v273
        %v381 = vunpack.c.h.b16 %v273
        %v382 = vpack.c.b16 %v320, %v318
        %v383 = vpack.c.b16 %v321, %v319
        %v384 = vpack.c.b16 %v324, %v322
        %v385 = vpack.c.b16 %v325, %v323
        %v386 = vpack.c.b16 %v328, %v326
        %v387 = vpack.c.b16 %v329, %v327
        %v388 = vpack.c.b16 %v332, %v330
        %v389 = vpack.c.b16 %v333, %v331
        %v390 = vpack.c.b16 %v336, %v334
        %v391 = vpack.c.b16 %v337, %v335
        %v392 = vpack.c.b16 %v340, %v338
        %v393 = vpack.c.b16 %v341, %v339
        %v394 = vpack.c.b16 %v344, %v342
        %v395 = vpack.c.b16 %v345, %v343
        %v396 = vpack.c.b16 %v348, %v346
        %v397 = vpack.c.b16 %v349, %v347
        %v398 = vpack.c.b16 %v352, %v350
        %v399 = vpack.c.b16 %v353, %v351
        %v400 = vpack.c.b16 %v356, %v354
        %v401 = vpack.c.b16 %v357, %v355
        %v402 = vpack.c.b16 %v360, %v358
        %v403 = vpack.c.b16 %v361, %v359
        %v404 = vpack.c.b16 %v364, %v362
        %v405 = vpack.c.b16 %v365, %v363
        %v406 = vpack.c.b16 %v368, %v366
        %v407 = vpack.c.b16 %v369, %v367
        %v408 = vpack.c.b16 %v372, %v370
        %v409 = vpack.c.b16 %v373, %v371
        %v410 = vpack.c.b16 %v376, %v374
        %v411 = vpack.c.b16 %v377, %v375
        %v412 = vpack.c.b16 %v380, %v378
        %v413 = vpack.c.b16 %v381, %v379
        %446 = vmatpush.bf16.msra.mxu0 %v396
        %447 = vmatpush.bf16.msra.mxu0 %v394
        %448 = vmatpush.bf16.msra.mxu0 %v392
        %449 = vmatpush.bf16.msra.mxu0 %v390
        %450 = vmatpush.bf16.msra.mxu0 %v388
        %451 = vmatpush.bf16.msra.mxu0 %v386
        %452 = vmatpush.bf16.msra.mxu0 %v384
        %453 = vmatpush.bf16.msra.mxu0 %v382
        %454 = vmatmul.bf16.gmra.mxu0 %v282
        %v455 = vpop.f32.mrf.mxu0
        %v456 = vadd.f32 %v276, %v455
        %v457 = vpop.f32.mrf.mxu0
        %458 = vdwg.mxu0
        %459 = vmatpush.bf16.msra.mxu0 %v412
        %460 = vmatpush.bf16.msra.mxu0 %v410
        %461 = vmatpush.bf16.msra.mxu0 %v408
        %462 = vmatpush.bf16.msra.mxu0 %v406
        %463 = vmatpush.bf16.msra.mxu0 %v404
        %464 = vmatpush.bf16.msra.mxu0 %v402
        %465 = vmatpush.bf16.msra.mxu0 %v400
        %466 = vmatpush.bf16.msra.mxu0 %v398
        %467 = vmatmul.bf16.gmra.mxu0 %v283
        %v468 = vpop.f32.mrf.mxu0
        %v469 = vadd.f32 %v456, %v468
        %v470 = vpop.f32.mrf.mxu0
        %471 = vdwg.mxu0
        %472 = vmatpush.bf16.msra.mxu0 %v397
        %473 = vmatpush.bf16.msra.mxu0 %v395
        %474 = vmatpush.bf16.msra.mxu0 %v393
        %475 = vmatpush.bf16.msra.mxu0 %v391
        %476 = vmatpush.bf16.msra.mxu0 %v389
        %477 = vmatpush.bf16.msra.mxu0 %v387
        %478 = vmatpush.bf16.msra.mxu0 %v385
        %479 = vmatpush.bf16.msra.mxu0 %v383
        %480 = vmatmul.bf16.gmra.mxu0 %v282
        %v481 = vpop.f32.mrf.mxu0
        %v482 = vadd.f32 %v277, %v481
        %v483 = vpop.f32.mrf.mxu0
        %484 = vdwg.mxu0
        %485 = vmatpush.bf16.msra.mxu0 %v413
        %486 = vmatpush.bf16.msra.mxu0 %v411
        %487 = vmatpush.bf16.msra.mxu0 %v409
        %488 = vmatpush.bf16.msra.mxu0 %v407
        %489 = vmatpush.bf16.msra.mxu0 %v405
        %490 = vmatpush.bf16.msra.mxu0 %v403
        %491 = vmatpush.bf16.msra.mxu0 %v401
        %492 = vmatpush.bf16.msra.mxu0 %v399
        %493 = vmatmul.bf16.gmra.mxu0 %v283
        %v494 = vpop.f32.mrf.mxu0
        %v495 = vadd.f32 %v482, %v494
        %v496 = vpop.f32.mrf.mxu0
        %497 = vdwg.mxu0
        %v498 = vld [vmem:[%s1] sm:$0xff]
        %v499 = vxor.u32 %v469, 2147483648
        %v500 = vxor.u32 %v495, 2147483648
        %v501 = vmul.f32 %v499, 1.442695
        %v502 = vpow.pop %v501
        %v503 = vmul.f32 %v500, 1.442695
        %v504 = vpow.pop %v503
        %v505 = vadd.f32 %v502, 1.0
        %v506 = vadd.f32 %v504, 1.0
        %v507 = vrcp.pop %v505
        %v508 = vmul.f32 %v505, %v507
        %v509 = vsub.f32 1.0, %v508
        %v510 = vmul.f32 %v507, %v509
        %v511 = vadd.f32 %v507, %v510
        %vm512 = vweird.f32 %v505
        %vm513 = vweird.f32 %v507
        %vm514 = vmor %vm512, %vm513
        %v515 = vsel %vm514, %v507, %v511
        %v516 = vand.u32 2147483647, %v505
        %vm517 = vcmp.eq.f32.partialorder %v516, 8.507059e+37
        %v518 = vand.u32 %v505, 2147483648
        %v519 = vor.u32 1.1754944e-38, %v518
        %v520 = vsel %vm517, %v519, %v515
        %v521 = vmul.f32 1.0, %v520
        %v522 = vrcp.pop %v506
        %v523 = vmul.f32 %v506, %v522
        %v524 = vsub.f32 1.0, %v523
        %v525 = vmul.f32 %v522, %v524
        %v526 = vadd.f32 %v522, %v525
        %vm527 = vweird.f32 %v506
        %vm528 = vweird.f32 %v522
        %vm529 = vmor %vm527, %vm528
        %v530 = vsel %vm529, %v522, %v526
        %v531 = vand.u32 2147483647, %v506
        %vm532 = vcmp.eq.f32.partialorder %v531, 8.507059e+37
        %v533 = vand.u32 %v506, 2147483648
        %v534 = vor.u32 1.1754944e-38, %v533
        %v535 = vsel %vm532, %v534, %v530
        %v536 = vmul.f32 1.0, %v535
        %v537 = vmul.f32 %v469, %v521
        %v538 = vmul.f32 %v495, %v536
        %v541 = vrot.slane %v538, 4
        %vm542 = vcmask 1043456
        %v543 = vsel %vm542, %v537, %v541
        %v545 = vadd.f32 %v498, %v543
        %547 = vst [vmem:[#allocation1] ss:$2 sm:$0xff] %v545
        %v548 = vld.sshfl [vmem:[#allocation1] sm:$0xff pattern:$0x75316420]
        %v549 = vld.sshfl [vmem:[#allocation1 + $0x8] sm:$0xff pattern:$0x75316420]
        %v552 = vpack.c.bf16 %v549, %v548
        %v554 = vrot.slane %v552, 2
        %vm555 = vcmask 1041408
        %v558 = vsel %vm555, %v552, %v554
        %560 = vst [vmem:[%s239] sm:$0xf] %v558
        %s561 = smul.u32 2, %s18
        %p562 = scmp.lt.s32.totalorder %s561, 5
        %s563 = scalar_select %p562, %s561, 5
        %s564 = smul.addr %s563, 2
        %s565 = scalar_lea.vmem %s4, %s564
        // Predicated region
        $region41: #{medusa_model_forward.2} parent=35 // pred_check
          %p566 = pneg %p130
        $region42: #{medusa_model_forward.2} parent=35 // pred_check_branch
          %568 = sbr.rel (%p566) target = $region44
        $region43: #{medusa_model_forward.2} parent=35 // pred_region
          %s569 = smul.u32 2, %s18
        $region44: #{medusa_model_forward.2} parent=35 // pred_fallthru
          _
      $region36: #{medusa_model_forward.2} parent=5 // pred_fallthru
        _
      %p570 = scmp.le.s32.totalorder 2, %s13
      // Predicated region
      $region45: #{medusa_model_forward.2} parent=5 // pred_check
        %p571 = pneg %p570
      $region46: #{medusa_model_forward.2} parent=5 // pred_check_branch
        %573 = sbr.rel (%p571) target = $region48
      $region47: #{medusa_model_forward.2} parent=5 // pred_region
        %s574 = ssub.s32 %s13, 2
        // Predicated region
        $region49: #{medusa_model_forward.2} parent=47 // pred_check
          %p575 = pneg %p136
        $region50: #{medusa_model_forward.2} parent=47 // pred_check_branch
          %577 = sbr.rel (%p575) target = $region52
        $region51: #{medusa_model_forward.2} parent=47 // pred_region
          %s578 = smul.u32 2, %s19
          %p579 = scmp.lt.s32.totalorder %s578, 5
          %s580 = scalar_select %p579, %s578, 5
          %s581 = smul.addr %s580, 2
          %s582 = scalar_lea.vmem %s4, %s581
        $region52: #{medusa_model_forward.2} parent=47 // pred_fallthru
          _
      $region48: #{medusa_model_forward.2} parent=5 // pred_fallthru
        _
    $region6: #{medusa_model_forward.2} parent=1 // loop_footer
      %s17 = sadd.s32 1, %s13
    $region7: #{medusa_model_forward.2} parent=1 // loop_footer_branch
      %12 = sbr.rel target = $region3
    $region8: #{medusa_model_forward.2} parent=1 // loop_exit
      _
    %583 = vsyncpa [#allocation3], 1
    %s584 = scalar_lea.sflag [#allocation3], 1
    %585 = vsyncpa %s584, 1

// kernel: medusa_model_forward.3
$region0: #{medusa_model_forward.3}
  #allocation0 [shape = 'u32[]', space=smem, size = 0x4, offset = 0x4, fixed_abs, tag = 'smem constant byte address 0x4 - core index']
  #allocation1 [shape = 'u32[72,128]{1,0:T(1,128)}', space=vmem, size = 0x9000, scoped, tag = 'internal scratch']
  %s0 = inlined_call_operand.vmem [shape: bf16[4,256], index: 0, kind: input, shape index: {}]
  %s1 = inlined_call_operand.vmem [shape: bf16[12,256], index: 1, kind: input, shape index: {}]
  %s2 = inlined_call_operand.hbm [shape: s8[256,1024], index: 2, kind: input, shape index: {}]
  %s3 = inlined_call_operand.vmem [shape: f32[1,1024], index: 3, kind: input, shape index: {}]
  %s4 = inlined_call_operand.hbm [shape: f32[4,1024], index: 4, kind: output, shape index: {0}]
  %s5 = inlined_call_operand.vmem [shape: f32[12,1024], index: 5, kind: output, shape index: {1}]
  %6 = xla_tuple %s4, %s5
  %s7 = sld [smem:[#allocation0]]
  $region38: #{medusa_model_forward.3} parent=0
    _
  %s9 = ssub.s32 1, %s7
  %s10 = scalar_select 0, %s9, %s7
  $region1: #{medusa_model_forward.3} parent=0
    #allocation2 [shape = 'u8[262144]{0}', space=vmem, size = 0x40000, scoped, tag = 'input window, operand 2, single buffered']
    #allocation3 [shape = 's32[1]{0}', space=sflag, size = 0x4, scoped, tag = 'scoped memory for medusa_model_forward.3']
    #allocation4 [shape = 's32[1]{0}', space=sflag, size = 0x4, scoped, tag = 'scoped memory for medusa_model_forward.3']
    #allocation5 [shape = 'u8[16384]{0}', space=vmem, size = 0x4000, scoped, tag = 'output window, operand 0, single buffered']
    %11 = vsyncpa [#allocation3], 0
    %12 = vsyncpa [#allocation4], 0
    // Predicated region
    $region2: #{medusa_model_forward.3} parent=1 // pred_check
      _
    $region3: #{medusa_model_forward.3} parent=1 // pred_check_branch
      %14 = sbr.rel (0) target = $region5
    $region4: #{medusa_model_forward.3} parent=1 // pred_region
      _
    $region5: #{medusa_model_forward.3} parent=1 // pred_fallthru
      _
    // Predicated region
    $region6: #{medusa_model_forward.3} parent=1 // pred_check
      _
    $region7: #{medusa_model_forward.3} parent=1 // pred_check_branch
      %16 = sbr.rel (0) target = $region9
    $region8: #{medusa_model_forward.3} parent=1 // pred_region
      _
    $region9: #{medusa_model_forward.3} parent=1 // pred_fallthru
      _
    // Predicated region
    $region10: #{medusa_model_forward.3} parent=1 // pred_check
      _
    $region11: #{medusa_model_forward.3} parent=1 // pred_check_branch
      %18 = sbr.rel (0) target = $region13
    $region12: #{medusa_model_forward.3} parent=1 // pred_region
      %20 = vsyncadd [#allocation3], 0
      %s21 = sshll.u32 %s2, 4
      %s22 = int_to_ptr.hbm [resolvable:$true] %s21
      %s23 = sshll.u32 [#allocation2], 4
      %s24 = int_to_ptr.vmem [resolvable:$true] %s23
      %29 = dma.hbm_to_vmem [thread:$0]  %s22, 8192, %s24, [#allocation3], 1024, 1024, 64
    $region13: #{medusa_model_forward.3} parent=1 // pred_fallthru
      _
    // Predicated region
    $region14: #{medusa_model_forward.3} parent=1 // pred_check
      _
    $region15: #{medusa_model_forward.3} parent=1 // pred_check_branch
      %31 = sbr.rel (0) target = $region17
    $region16: #{medusa_model_forward.3} parent=1 // pred_region
      _
    $region17: #{medusa_model_forward.3} parent=1 // pred_fallthru
      _
    // Predicated region
    $region18: #{medusa_model_forward.3} parent=1 // pred_check
      _
    $region19: #{medusa_model_forward.3} parent=1 // pred_check_branch
      %33 = sbr.rel (0) target = $region21
    $region20: #{medusa_model_forward.3} parent=1 // pred_region
      %35 = dma.done [#allocation3], 8192
    $region21: #{medusa_model_forward.3} parent=1 // pred_fallthru
      _
    %v36 = vld [vmem:[#allocation2] sm:$0xff]
    %v37 = vld [vmem:[#allocation2 + $0x8] sm:$0xff]
    %v38 = vld [vmem:[#allocation2 + $0x10] sm:$0xff]
    %v39 = vld [vmem:[#allocation2 + $0x18] sm:$0xff]
    %v40 = vld [vmem:[#allocation2 + $0x20] sm:$0xff]
    %v41 = vld [vmem:[#allocation2 + $0x28] sm:$0xff]
    %v42 = vld [vmem:[#allocation2 + $0x30] sm:$0xff]
    %v43 = vld [vmem:[#allocation2 + $0x38] sm:$0xff]
    %v44 = vld [vmem:[#allocation2 + $0x40] sm:$0xff]
    %v45 = vld [vmem:[#allocation2 + $0x48] sm:$0xff]
    %v46 = vld [vmem:[#allocation2 + $0x50] sm:$0xff]
    %v47 = vld [vmem:[#allocation2 + $0x58] sm:$0xff]
    %v48 = vld [vmem:[#allocation2 + $0x60] sm:$0xff]
    %v49 = vld [vmem:[#allocation2 + $0x68] sm:$0xff]
    %v50 = vld [vmem:[#allocation2 + $0x70] sm:$0xff]
    %v51 = vld [vmem:[#allocation2 + $0x78] sm:$0xff]
    %v52 = vld [vmem:[#allocation2 + $0x80] sm:$0xff]
    %v53 = vld [vmem:[#allocation2 + $0x88] sm:$0xff]
    %v54 = vld [vmem:[#allocation2 + $0x90] sm:$0xff]
    %v55 = vld [vmem:[#allocation2 + $0x98] sm:$0xff]
    %v56 = vld [vmem:[#allocation2 + $0xa0] sm:$0xff]
    %v57 = vld [vmem:[#allocation2 + $0xa8] sm:$0xff]
    %v58 = vld [vmem:[#allocation2 + $0xb0] sm:$0xff]
    %v59 = vld [vmem:[#allocation2 + $0xb8] sm:$0xff]
    %v60 = vld [vmem:[#allocation2 + $0xc0] sm:$0xff]
    %v61 = vld [vmem:[#allocation2 + $0xc8] sm:$0xff]
    %v62 = vld [vmem:[#allocation2 + $0xd0] sm:$0xff]
    %v63 = vld [vmem:[#allocation2 + $0xd8] sm:$0xff]
    %v64 = vld [vmem:[#allocation2 + $0xe0] sm:$0xff]
    %v65 = vld [vmem:[#allocation2 + $0xe8] sm:$0xff]
    %v66 = vld [vmem:[#allocation2 + $0xf0] sm:$0xff]
    %v67 = vld [vmem:[#allocation2 + $0xf8] sm:$0xff]
    %v68 = vld [vmem:[#allocation2 + $0x100] sm:$0xff]
    %v69 = vld [vmem:[#allocation2 + $0x108] sm:$0xff]
    %v70 = vld [vmem:[#allocation2 + $0x110] sm:$0xff]
    %v71 = vld [vmem:[#allocation2 + $0x118] sm:$0xff]
    %v72 = vld [vmem:[#allocation2 + $0x120] sm:$0xff]
    %v73 = vld [vmem:[#allocation2 + $0x128] sm:$0xff]
    %v74 = vld [vmem:[#allocation2 + $0x130] sm:$0xff]
    %v75 = vld [vmem:[#allocation2 + $0x138] sm:$0xff]
    %v76 = vld [vmem:[#allocation2 + $0x140] sm:$0xff]
    %v77 = vld [vmem:[#allocation2 + $0x148] sm:$0xff]
    %v78 = vld [vmem:[#allocation2 + $0x150] sm:$0xff]
    %v79 = vld [vmem:[#allocation2 + $0x158] sm:$0xff]
    %v80 = vld [vmem:[#allocation2 + $0x160] sm:$0xff]
    %v81 = vld [vmem:[#allocation2 + $0x168] sm:$0xff]
    %v82 = vld [vmem:[#allocation2 + $0x170] sm:$0xff]
    %v83 = vld [vmem:[#allocation2 + $0x178] sm:$0xff]
    %v84 = vld [vmem:[#allocation2 + $0x180] sm:$0xff]
    %v85 = vld [vmem:[#allocation2 + $0x188] sm:$0xff]
    %v86 = vld [vmem:[#allocation2 + $0x190] sm:$0xff]
    %v87 = vld [vmem:[#allocation2 + $0x198] sm:$0xff]
    %v88 = vld [vmem:[#allocation2 + $0x1a0] sm:$0xff]
    %v89 = vld [vmem:[#allocation2 + $0x1a8] sm:$0xff]
    %v90 = vld [vmem:[#allocation2 + $0x1b0] sm:$0xff]
    %v91 = vld [vmem:[#allocation2 + $0x1b8] sm:$0xff]
    %v92 = vld [vmem:[#allocation2 + $0x1c0] sm:$0xff]
    %v93 = vld [vmem:[#allocation2 + $0x1c8] sm:$0xff]
    %v94 = vld [vmem:[#allocation2 + $0x1d0] sm:$0xff]
    %v95 = vld [vmem:[#allocation2 + $0x1d8] sm:$0xff]
    %v96 = vld [vmem:[#allocation2 + $0x1e0] sm:$0xff]
    %v97 = vld [vmem:[#allocation2 + $0x1e8] sm:$0xff]
    %v98 = vld [vmem:[#allocation2 + $0x1f0] sm:$0xff]
    %v99 = vld [vmem:[#allocation2 + $0x1f8] sm:$0xff]
    %v100 = vunpack.c.0.s8 %v36
    %v101 = vunpack.c.0.s8 %v37
    %v102 = vunpack.c.0.s8 %v38
    %v103 = vunpack.c.0.s8 %v39
    %v104 = vunpack.c.0.s8 %v40
    %v105 = vunpack.c.0.s8 %v41
    %v106 = vunpack.c.0.s8 %v42
    %v107 = vunpack.c.0.s8 %v43
    %v108 = vunpack.c.1.s8 %v36
    %v109 = vunpack.c.1.s8 %v37
    %v110 = vunpack.c.1.s8 %v38
    %v111 = vunpack.c.1.s8 %v39
    %v112 = vunpack.c.1.s8 %v40
    %v113 = vunpack.c.1.s8 %v41
    %v114 = vunpack.c.1.s8 %v42
    %v115 = vunpack.c.1.s8 %v43
    %v116 = vunpack.c.2.s8 %v36
    %v117 = vunpack.c.2.s8 %v37
    %v118 = vunpack.c.2.s8 %v38
    %v119 = vunpack.c.2.s8 %v39
    %v120 = vunpack.c.2.s8 %v40
    %v121 = vunpack.c.2.s8 %v41
    %v122 = vunpack.c.2.s8 %v42
    %v123 = vunpack.c.2.s8 %v43
    %v124 = vunpack.c.3.s8 %v36
    %v125 = vunpack.c.3.s8 %v37
    %v126 = vunpack.c.3.s8 %v38
    %v127 = vunpack.c.3.s8 %v39
    %v128 = vunpack.c.3.s8 %v40
    %v129 = vunpack.c.3.s8 %v41
    %v130 = vunpack.c.3.s8 %v42
    %v131 = vunpack.c.3.s8 %v43
    %v132 = vunpack.c.0.s8 %v44
    %v133 = vunpack.c.0.s8 %v45
    %v134 = vunpack.c.0.s8 %v46
    %v135 = vunpack.c.0.s8 %v47
    %v136 = vunpack.c.0.s8 %v48
    %v137 = vunpack.c.0.s8 %v49
    %v138 = vunpack.c.0.s8 %v50
    %v139 = vunpack.c.0.s8 %v51
    %v140 = vunpack.c.1.s8 %v44
    %v141 = vunpack.c.1.s8 %v45
    %v142 = vunpack.c.1.s8 %v46
    %v143 = vunpack.c.1.s8 %v47
    %v144 = vunpack.c.1.s8 %v48
    %v145 = vunpack.c.1.s8 %v49
    %v146 = vunpack.c.1.s8 %v50
    %v147 = vunpack.c.1.s8 %v51
    %v148 = vunpack.c.2.s8 %v44
    %v149 = vunpack.c.2.s8 %v45
    %v150 = vunpack.c.2.s8 %v46
    %v151 = vunpack.c.2.s8 %v47
    %v152 = vunpack.c.2.s8 %v48
    %v153 = vunpack.c.2.s8 %v49
    %v154 = vunpack.c.2.s8 %v50
    %v155 = vunpack.c.2.s8 %v51
    %v156 = vunpack.c.3.s8 %v44
    %v157 = vunpack.c.3.s8 %v45
    %v158 = vunpack.c.3.s8 %v46
    %v159 = vunpack.c.3.s8 %v47
    %v160 = vunpack.c.3.s8 %v48
    %v161 = vunpack.c.3.s8 %v49
    %v162 = vunpack.c.3.s8 %v50
    %v163 = vunpack.c.3.s8 %v51
    %v164 = vunpack.c.0.s8 %v52
    %v165 = vunpack.c.0.s8 %v53
    %v166 = vunpack.c.0.s8 %v54
    %v167 = vunpack.c.0.s8 %v55
    %v168 = vunpack.c.0.s8 %v56
    %v169 = vunpack.c.0.s8 %v57
    %v170 = vunpack.c.0.s8 %v58
    %v171 = vunpack.c.0.s8 %v59
    %v172 = vunpack.c.1.s8 %v52
    %v173 = vunpack.c.1.s8 %v53
    %v174 = vunpack.c.1.s8 %v54
    %v175 = vunpack.c.1.s8 %v55
    %v176 = vunpack.c.1.s8 %v56
    %v177 = vunpack.c.1.s8 %v57
    %v178 = vunpack.c.1.s8 %v58
    %v179 = vunpack.c.1.s8 %v59
    %v180 = vunpack.c.2.s8 %v52
    %v181 = vunpack.c.2.s8 %v53
    %v182 = vunpack.c.2.s8 %v54
    %v183 = vunpack.c.2.s8 %v55
    %v184 = vunpack.c.2.s8 %v56
    %v185 = vunpack.c.2.s8 %v57
    %v186 = vunpack.c.2.s8 %v58
    %v187 = vunpack.c.2.s8 %v59
    %v188 = vunpack.c.3.s8 %v52
    %v189 = vunpack.c.3.s8 %v53
    %v190 = vunpack.c.3.s8 %v54
    %v191 = vunpack.c.3.s8 %v55
    %v192 = vunpack.c.3.s8 %v56
    %v193 = vunpack.c.3.s8 %v57
    %v194 = vunpack.c.3.s8 %v58
    %v195 = vunpack.c.3.s8 %v59
    %v196 = vunpack.c.0.s8 %v60
    %v197 = vunpack.c.0.s8 %v61
    %v198 = vunpack.c.0.s8 %v62
    %v199 = vunpack.c.0.s8 %v63
    %v200 = vunpack.c.0.s8 %v64
    %v201 = vunpack.c.0.s8 %v65
    %v202 = vunpack.c.0.s8 %v66
    %v203 = vunpack.c.0.s8 %v67
    %v204 = vunpack.c.1.s8 %v60
    %v205 = vunpack.c.1.s8 %v61
    %v206 = vunpack.c.1.s8 %v62
    %v207 = vunpack.c.1.s8 %v63
    %v208 = vunpack.c.1.s8 %v64
    %v209 = vunpack.c.1.s8 %v65
    %v210 = vunpack.c.1.s8 %v66
    %v211 = vunpack.c.1.s8 %v67
    %v212 = vunpack.c.2.s8 %v60
    %v213 = vunpack.c.2.s8 %v61
    %v214 = vunpack.c.2.s8 %v62
    %v215 = vunpack.c.2.s8 %v63
    %v216 = vunpack.c.2.s8 %v64
    %v217 = vunpack.c.2.s8 %v65
    %v218 = vunpack.c.2.s8 %v66
    %v219 = vunpack.c.2.s8 %v67
    %v220 = vunpack.c.3.s8 %v60
    %v221 = vunpack.c.3.s8 %v61
    %v222 = vunpack.c.3.s8 %v62
    %v223 = vunpack.c.3.s8 %v63
    %v224 = vunpack.c.3.s8 %v64
    %v225 = vunpack.c.3.s8 %v65
    %v226 = vunpack.c.3.s8 %v66
    %v227 = vunpack.c.3.s8 %v67
    %v228 = vunpack.c.0.s8 %v68
    %v229 = vunpack.c.0.s8 %v69
    %v230 = vunpack.c.0.s8 %v70
    %v231 = vunpack.c.0.s8 %v71
    %v232 = vunpack.c.0.s8 %v72
    %v233 = vunpack.c.0.s8 %v73
    %v234 = vunpack.c.0.s8 %v74
    %v235 = vunpack.c.0.s8 %v75
    %v236 = vunpack.c.1.s8 %v68
    %v237 = vunpack.c.1.s8 %v69
    %v238 = vunpack.c.1.s8 %v70
    %v239 = vunpack.c.1.s8 %v71
    %v240 = vunpack.c.1.s8 %v72
    %v241 = vunpack.c.1.s8 %v73
    %v242 = vunpack.c.1.s8 %v74
    %v243 = vunpack.c.1.s8 %v75
    %v244 = vunpack.c.2.s8 %v68
    %v245 = vunpack.c.2.s8 %v69
    %v246 = vunpack.c.2.s8 %v70
    %v247 = vunpack.c.2.s8 %v71
    %v248 = vunpack.c.2.s8 %v72
    %v249 = vunpack.c.2.s8 %v73
    %v250 = vunpack.c.2.s8 %v74
    %v251 = vunpack.c.2.s8 %v75
    %v252 = vunpack.c.3.s8 %v68
    %v253 = vunpack.c.3.s8 %v69
    %v254 = vunpack.c.3.s8 %v70
    %v255 = vunpack.c.3.s8 %v71
    %v256 = vunpack.c.3.s8 %v72
    %v257 = vunpack.c.3.s8 %v73
    %v258 = vunpack.c.3.s8 %v74
    %v259 = vunpack.c.3.s8 %v75
    %v260 = vunpack.c.0.s8 %v76
    %v261 = vunpack.c.0.s8 %v77
    %v262 = vunpack.c.0.s8 %v78
    %v263 = vunpack.c.0.s8 %v79
    %v264 = vunpack.c.0.s8 %v80
    %v265 = vunpack.c.0.s8 %v81
    %v266 = vunpack.c.0.s8 %v82
    %v267 = vunpack.c.0.s8 %v83
    %v268 = vunpack.c.1.s8 %v76
    %v269 = vunpack.c.1.s8 %v77
    %v270 = vunpack.c.1.s8 %v78
    %v271 = vunpack.c.1.s8 %v79
    %v272 = vunpack.c.1.s8 %v80
    %v273 = vunpack.c.1.s8 %v81
    %v274 = vunpack.c.1.s8 %v82
    %v275 = vunpack.c.1.s8 %v83
    %v276 = vunpack.c.2.s8 %v76
    %v277 = vunpack.c.2.s8 %v77
    %v278 = vunpack.c.2.s8 %v78
    %v279 = vunpack.c.2.s8 %v79
    %v280 = vunpack.c.2.s8 %v80
    %v281 = vunpack.c.2.s8 %v81
    %v282 = vunpack.c.2.s8 %v82
    %v283 = vunpack.c.2.s8 %v83
    %v284 = vunpack.c.3.s8 %v76
    %v285 = vunpack.c.3.s8 %v77
    %v286 = vunpack.c.3.s8 %v78
    %v287 = vunpack.c.3.s8 %v79
    %v288 = vunpack.c.3.s8 %v80
    %v289 = vunpack.c.3.s8 %v81
    %v290 = vunpack.c.3.s8 %v82
    %v291 = vunpack.c.3.s8 %v83
    %v292 = vunpack.c.0.s8 %v84
    %v293 = vunpack.c.0.s8 %v85
    %v294 = vunpack.c.0.s8 %v86
    %v295 = vunpack.c.0.s8 %v87
    %v296 = vunpack.c.0.s8 %v88
    %v297 = vunpack.c.0.s8 %v89
    %v298 = vunpack.c.0.s8 %v90
    %v299 = vunpack.c.0.s8 %v91
    %v300 = vunpack.c.1.s8 %v84
    %v301 = vunpack.c.1.s8 %v85
    %v302 = vunpack.c.1.s8 %v86
    %v303 = vunpack.c.1.s8 %v87
    %v304 = vunpack.c.1.s8 %v88
    %v305 = vunpack.c.1.s8 %v89
    %v306 = vunpack.c.1.s8 %v90
    %v307 = vunpack.c.1.s8 %v91
    %v308 = vunpack.c.2.s8 %v84
    %v309 = vunpack.c.2.s8 %v85
    %v310 = vunpack.c.2.s8 %v86
    %v311 = vunpack.c.2.s8 %v87
    %v312 = vunpack.c.2.s8 %v88
    %v313 = vunpack.c.2.s8 %v89
    %v314 = vunpack.c.2.s8 %v90
    %v315 = vunpack.c.2.s8 %v91
    %v316 = vunpack.c.3.s8 %v84
    %v317 = vunpack.c.3.s8 %v85
    %v318 = vunpack.c.3.s8 %v86
    %v319 = vunpack.c.3.s8 %v87
    %v320 = vunpack.c.3.s8 %v88
    %v321 = vunpack.c.3.s8 %v89
    %v322 = vunpack.c.3.s8 %v90
    %v323 = vunpack.c.3.s8 %v91
    %v324 = vunpack.c.0.s8 %v92
    %v325 = vunpack.c.0.s8 %v93
    %v326 = vunpack.c.0.s8 %v94
    %v327 = vunpack.c.0.s8 %v95
    %v328 = vunpack.c.0.s8 %v96
    %v329 = vunpack.c.0.s8 %v97
    %v330 = vunpack.c.0.s8 %v98
    %v331 = vunpack.c.0.s8 %v99
    %v332 = vunpack.c.1.s8 %v92
    %v333 = vunpack.c.1.s8 %v93
    %v334 = vunpack.c.1.s8 %v94
    %v335 = vunpack.c.1.s8 %v95
    %v336 = vunpack.c.1.s8 %v96
    %v337 = vunpack.c.1.s8 %v97
    %v338 = vunpack.c.1.s8 %v98
    %v339 = vunpack.c.1.s8 %v99
    %v340 = vunpack.c.2.s8 %v92
    %v341 = vunpack.c.2.s8 %v93
    %v342 = vunpack.c.2.s8 %v94
    %v343 = vunpack.c.2.s8 %v95
    %v344 = vunpack.c.2.s8 %v96
    %v345 = vunpack.c.2.s8 %v97
    %v346 = vunpack.c.2.s8 %v98
    %v347 = vunpack.c.2.s8 %v99
    %v348 = vunpack.c.3.s8 %v92
    %v349 = vunpack.c.3.s8 %v93
    %v350 = vunpack.c.3.s8 %v94
    %v351 = vunpack.c.3.s8 %v95
    %v352 = vunpack.c.3.s8 %v96
    %v353 = vunpack.c.3.s8 %v97
    %v354 = vunpack.c.3.s8 %v98
    %v355 = vunpack.c.3.s8 %v99
    %v356 = vcvt.s32.f32 %v100
    %v357 = vcvt.s32.f32 %v101
    %v358 = vcvt.s32.f32 %v102
    %v359 = vcvt.s32.f32 %v103
    %v360 = vcvt.s32.f32 %v104
    %v361 = vcvt.s32.f32 %v105
    %v362 = vcvt.s32.f32 %v106
    %v363 = vcvt.s32.f32 %v107
    %v364 = vcvt.s32.f32 %v108
    %v365 = vcvt.s32.f32 %v109
    %v366 = vcvt.s32.f32 %v110
    %v367 = vcvt.s32.f32 %v111
    %v368 = vcvt.s32.f32 %v112
    %v369 = vcvt.s32.f32 %v113
    %v370 = vcvt.s32.f32 %v114
    %v371 = vcvt.s32.f32 %v115
    %v372 = vcvt.s32.f32 %v116
    %v373 = vcvt.s32.f32 %v117
    %v374 = vcvt.s32.f32 %v118
    %v375 = vcvt.s32.f32 %v119
    %v376 = vcvt.s32.f32 %v120
    %v377 = vcvt.s32.f32 %v121
    %v378 = vcvt.s32.f32 %v122
    %v379 = vcvt.s32.f32 %v123
    %v380 = vcvt.s32.f32 %v124
    %v381 = vcvt.s32.f32 %v125
    %v382 = vcvt.s32.f32 %v126
    %v383 = vcvt.s32.f32 %v127
    %v384 = vcvt.s32.f32 %v128
    %v385 = vcvt.s32.f32 %v129
    %v386 = vcvt.s32.f32 %v130
    %v387 = vcvt.s32.f32 %v131
    %v388 = vcvt.s32.f32 %v132
    %v389 = vcvt.s32.f32 %v133
    %v390 = vcvt.s32.f32 %v134
    %v391 = vcvt.s32.f32 %v135
    %v392 = vcvt.s32.f32 %v136
    %v393 = vcvt.s32.f32 %v137
    %v394 = vcvt.s32.f32 %v138
    %v395 = vcvt.s32.f32 %v139
    %v396 = vcvt.s32.f32 %v140
    %v397 = vcvt.s32.f32 %v141
    %v398 = vcvt.s32.f32 %v142
    %v399 = vcvt.s32.f32 %v143
    %v400 = vcvt.s32.f32 %v144
    %v401 = vcvt.s32.f32 %v145
    %v402 = vcvt.s32.f32 %v146
    %v403 = vcvt.s32.f32 %v147
    %v404 = vcvt.s32.f32 %v148
    %v405 = vcvt.s32.f32 %v149
    %v406 = vcvt.s32.f32 %v150
    %v407 = vcvt.s32.f32 %v151
    %v408 = vcvt.s32.f32 %v152
    %v409 = vcvt.s32.f32 %v153
    %v410 = vcvt.s32.f32 %v154
    %v411 = vcvt.s32.f32 %v155
    %v412 = vcvt.s32.f32 %v156
    %v413 = vcvt.s32.f32 %v157
    %v414 = vcvt.s32.f32 %v158
    %v415 = vcvt.s32.f32 %v159
    %v416 = vcvt.s32.f32 %v160
    %v417 = vcvt.s32.f32 %v161
    %v418 = vcvt.s32.f32 %v162
    %v419 = vcvt.s32.f32 %v163
    %v420 = vcvt.s32.f32 %v164
    %v421 = vcvt.s32.f32 %v165
    %v422 = vcvt.s32.f32 %v166
    %v423 = vcvt.s32.f32 %v167
    %v424 = vcvt.s32.f32 %v168
    %v425 = vcvt.s32.f32 %v169
    %v426 = vcvt.s32.f32 %v170
    %v427 = vcvt.s32.f32 %v171
    %v428 = vcvt.s32.f32 %v172
    %v429 = vcvt.s32.f32 %v173
    %v430 = vcvt.s32.f32 %v174
    %v431 = vcvt.s32.f32 %v175
    %v432 = vcvt.s32.f32 %v176
    %v433 = vcvt.s32.f32 %v177
    %v434 = vcvt.s32.f32 %v178
    %v435 = vcvt.s32.f32 %v179
    %v436 = vcvt.s32.f32 %v180
    %v437 = vcvt.s32.f32 %v181
    %v438 = vcvt.s32.f32 %v182
    %v439 = vcvt.s32.f32 %v183
    %v440 = vcvt.s32.f32 %v184
    %v441 = vcvt.s32.f32 %v185
    %v442 = vcvt.s32.f32 %v186
    %v443 = vcvt.s32.f32 %v187
    %v444 = vcvt.s32.f32 %v188
    %v445 = vcvt.s32.f32 %v189
    %v446 = vcvt.s32.f32 %v190
    %v447 = vcvt.s32.f32 %v191
    %v448 = vcvt.s32.f32 %v192
    %v449 = vcvt.s32.f32 %v193
    %v450 = vcvt.s32.f32 %v194
    %v451 = vcvt.s32.f32 %v195
    %v452 = vcvt.s32.f32 %v196
    %v453 = vcvt.s32.f32 %v197
    %v454 = vcvt.s32.f32 %v198
    %v455 = vcvt.s32.f32 %v199
    %v456 = vcvt.s32.f32 %v200
    %v457 = vcvt.s32.f32 %v201
    %v458 = vcvt.s32.f32 %v202
    %v459 = vcvt.s32.f32 %v203
    %v460 = vcvt.s32.f32 %v204
    %v461 = vcvt.s32.f32 %v205
    %v462 = vcvt.s32.f32 %v206
    %v463 = vcvt.s32.f32 %v207
    %v464 = vcvt.s32.f32 %v208
    %v465 = vcvt.s32.f32 %v209
    %v466 = vcvt.s32.f32 %v210
    %v467 = vcvt.s32.f32 %v211
    %v468 = vcvt.s32.f32 %v212
    %v469 = vcvt.s32.f32 %v213
    %v470 = vcvt.s32.f32 %v214
    %v471 = vcvt.s32.f32 %v215
    %v472 = vcvt.s32.f32 %v216
    %v473 = vcvt.s32.f32 %v217
    %v474 = vcvt.s32.f32 %v218
    %v475 = vcvt.s32.f32 %v219
    %v476 = vcvt.s32.f32 %v220
    %v477 = vcvt.s32.f32 %v221
    %v478 = vcvt.s32.f32 %v222
    %v479 = vcvt.s32.f32 %v223
    %v480 = vcvt.s32.f32 %v224
    %v481 = vcvt.s32.f32 %v225
    %v482 = vcvt.s32.f32 %v226
    %v483 = vcvt.s32.f32 %v227
    %v484 = vcvt.s32.f32 %v228
    %v485 = vcvt.s32.f32 %v229
    %v486 = vcvt.s32.f32 %v230
    %v487 = vcvt.s32.f32 %v231
    %v488 = vcvt.s32.f32 %v232
    %v489 = vcvt.s32.f32 %v233
    %v490 = vcvt.s32.f32 %v234
    %v491 = vcvt.s32.f32 %v235
    %v492 = vcvt.s32.f32 %v236
    %v493 = vcvt.s32.f32 %v237
    %v494 = vcvt.s32.f32 %v238
    %v495 = vcvt.s32.f32 %v239
    %v496 = vcvt.s32.f32 %v240
    %v497 = vcvt.s32.f32 %v241
    %v498 = vcvt.s32.f32 %v242
    %v499 = vcvt.s32.f32 %v243
    %v500 = vcvt.s32.f32 %v244
    %v501 = vcvt.s32.f32 %v245
    %v502 = vcvt.s32.f32 %v246
    %v503 = vcvt.s32.f32 %v247
    %v504 = vcvt.s32.f32 %v248
    %v505 = vcvt.s32.f32 %v249
    %v506 = vcvt.s32.f32 %v250
    %v507 = vcvt.s32.f32 %v251
    %v508 = vcvt.s32.f32 %v252
    %v509 = vcvt.s32.f32 %v253
    %v510 = vcvt.s32.f32 %v254
    %v511 = vcvt.s32.f32 %v255
    %v512 = vcvt.s32.f32 %v256
    %v513 = vcvt.s32.f32 %v257
    %v514 = vcvt.s32.f32 %v258
    %v515 = vcvt.s32.f32 %v259
    %v516 = vcvt.s32.f32 %v260
    %v517 = vcvt.s32.f32 %v261
    %v518 = vcvt.s32.f32 %v262
    %v519 = vcvt.s32.f32 %v263
    %v520 = vcvt.s32.f32 %v264
    %v521 = vcvt.s32.f32 %v265
    %v522 = vcvt.s32.f32 %v266
    %v523 = vcvt.s32.f32 %v267
    %v524 = vcvt.s32.f32 %v268
    %v525 = vcvt.s32.f32 %v269
    %v526 = vcvt.s32.f32 %v270
    %v527 = vcvt.s32.f32 %v271
    %v528 = vcvt.s32.f32 %v272
    %v529 = vcvt.s32.f32 %v273
    %v530 = vcvt.s32.f32 %v274
    %v531 = vcvt.s32.f32 %v275
    %v532 = vcvt.s32.f32 %v276
    %v533 = vcvt.s32.f32 %v277
    %v534 = vcvt.s32.f32 %v278
    %v535 = vcvt.s32.f32 %v279
    %v536 = vcvt.s32.f32 %v280
    %v537 = vcvt.s32.f32 %v281
    %v538 = vcvt.s32.f32 %v282
    %v539 = vcvt.s32.f32 %v283
    %v540 = vcvt.s32.f32 %v284
    %v541 = vcvt.s32.f32 %v285
    %v542 = vcvt.s32.f32 %v286
    %v543 = vcvt.s32.f32 %v287
    %v544 = vcvt.s32.f32 %v288
    %v545 = vcvt.s32.f32 %v289
    %v546 = vcvt.s32.f32 %v290
    %v547 = vcvt.s32.f32 %v291
    %v548 = vcvt.s32.f32 %v292
    %v549 = vcvt.s32.f32 %v293
    %v550 = vcvt.s32.f32 %v294
    %v551 = vcvt.s32.f32 %v295
    %v552 = vcvt.s32.f32 %v296
    %v553 = vcvt.s32.f32 %v297
    %v554 = vcvt.s32.f32 %v298
    %v555 = vcvt.s32.f32 %v299
    %v556 = vcvt.s32.f32 %v300
    %v557 = vcvt.s32.f32 %v301
    %v558 = vcvt.s32.f32 %v302
    %v559 = vcvt.s32.f32 %v303
    %v560 = vcvt.s32.f32 %v304
    %v561 = vcvt.s32.f32 %v305
    %v562 = vcvt.s32.f32 %v306
    %v563 = vcvt.s32.f32 %v307
    %v564 = vcvt.s32.f32 %v308
    %v565 = vcvt.s32.f32 %v309
    %v566 = vcvt.s32.f32 %v310
    %v567 = vcvt.s32.f32 %v311
    %v568 = vcvt.s32.f32 %v312
    %v569 = vcvt.s32.f32 %v313
    %v570 = vcvt.s32.f32 %v314
    %v571 = vcvt.s32.f32 %v315
    %v572 = vcvt.s32.f32 %v316
    %v573 = vcvt.s32.f32 %v317
    %v574 = vcvt.s32.f32 %v318
    %v575 = vcvt.s32.f32 %v319
    %v576 = vcvt.s32.f32 %v320
    %v577 = vcvt.s32.f32 %v321
    %v578 = vcvt.s32.f32 %v322
    %v579 = vcvt.s32.f32 %v323
    %v580 = vcvt.s32.f32 %v324
    %v581 = vcvt.s32.f32 %v325
    %v582 = vcvt.s32.f32 %v326
    %v583 = vcvt.s32.f32 %v327
    %v584 = vcvt.s32.f32 %v328
    %v585 = vcvt.s32.f32 %v329
    %v586 = vcvt.s32.f32 %v330
    %v587 = vcvt.s32.f32 %v331
    %v588 = vcvt.s32.f32 %v332
    %v589 = vcvt.s32.f32 %v333
    %v590 = vcvt.s32.f32 %v334
    %v591 = vcvt.s32.f32 %v335
    %v592 = vcvt.s32.f32 %v336
    %v593 = vcvt.s32.f32 %v337
    %v594 = vcvt.s32.f32 %v338
    %v595 = vcvt.s32.f32 %v339
    %v596 = vcvt.s32.f32 %v340
    %v597 = vcvt.s32.f32 %v341
    %v598 = vcvt.s32.f32 %v342
    %v599 = vcvt.s32.f32 %v343
    %v600 = vcvt.s32.f32 %v344
    %v601 = vcvt.s32.f32 %v345
    %v602 = vcvt.s32.f32 %v346
    %v603 = vcvt.s32.f32 %v347
    %v604 = vcvt.s32.f32 %v348
    %v605 = vcvt.s32.f32 %v349
    %v606 = vcvt.s32.f32 %v350
    %v607 = vcvt.s32.f32 %v351
    %v608 = vcvt.s32.f32 %v352
    %v609 = vcvt.s32.f32 %v353
    %v610 = vcvt.s32.f32 %v354
    %v611 = vcvt.s32.f32 %v355
    %v612 = vpack.c.bf16 %v364, %v356
    %v613 = vpack.c.bf16 %v365, %v357
    %v614 = vpack.c.bf16 %v366, %v358
    %v615 = vpack.c.bf16 %v367, %v359
    %v616 = vpack.c.bf16 %v368, %v360
    %v617 = vpack.c.bf16 %v369, %v361
    %v618 = vpack.c.bf16 %v370, %v362
    %v619 = vpack.c.bf16 %v371, %v363
    %v620 = vpack.c.bf16 %v380, %v372
    %v621 = vpack.c.bf16 %v381, %v373
    %v622 = vpack.c.bf16 %v382, %v374
    %v623 = vpack.c.bf16 %v383, %v375
    %v624 = vpack.c.bf16 %v384, %v376
    %v625 = vpack.c.bf16 %v385, %v377
    %v626 = vpack.c.bf16 %v386, %v378
    %v627 = vpack.c.bf16 %v387, %v379
    %v628 = vpack.c.bf16 %v396, %v388
    %v629 = vpack.c.bf16 %v397, %v389
    %v630 = vpack.c.bf16 %v398, %v390
    %v631 = vpack.c.bf16 %v399, %v391
    %v632 = vpack.c.bf16 %v400, %v392
    %v633 = vpack.c.bf16 %v401, %v393
    %v634 = vpack.c.bf16 %v402, %v394
    %v635 = vpack.c.bf16 %v403, %v395
    %v636 = vpack.c.bf16 %v412, %v404
    %v637 = vpack.c.bf16 %v413, %v405
    %v638 = vpack.c.bf16 %v414, %v406
    %v639 = vpack.c.bf16 %v415, %v407
    %v640 = vpack.c.bf16 %v416, %v408
    %v641 = vpack.c.bf16 %v417, %v409
    %v642 = vpack.c.bf16 %v418, %v410
    %v643 = vpack.c.bf16 %v419, %v411
    %v644 = vpack.c.bf16 %v428, %v420
    %v645 = vpack.c.bf16 %v429, %v421
    %v646 = vpack.c.bf16 %v430, %v422
    %v647 = vpack.c.bf16 %v431, %v423
    %v648 = vpack.c.bf16 %v432, %v424
    %v649 = vpack.c.bf16 %v433, %v425
    %v650 = vpack.c.bf16 %v434, %v426
    %v651 = vpack.c.bf16 %v435, %v427
    %v652 = vpack.c.bf16 %v444, %v436
    %v653 = vpack.c.bf16 %v445, %v437
    %v654 = vpack.c.bf16 %v446, %v438
    %v655 = vpack.c.bf16 %v447, %v439
    %v656 = vpack.c.bf16 %v448, %v440
    %v657 = vpack.c.bf16 %v449, %v441
    %v658 = vpack.c.bf16 %v450, %v442
    %v659 = vpack.c.bf16 %v451, %v443
    %v660 = vpack.c.bf16 %v460, %v452
    %v661 = vpack.c.bf16 %v461, %v453
    %v662 = vpack.c.bf16 %v462, %v454
    %v663 = vpack.c.bf16 %v463, %v455
    %v664 = vpack.c.bf16 %v464, %v456
    %v665 = vpack.c.bf16 %v465, %v457
    %v666 = vpack.c.bf16 %v466, %v458
    %v667 = vpack.c.bf16 %v467, %v459
    %v668 = vpack.c.bf16 %v476, %v468
    %v669 = vpack.c.bf16 %v477, %v469
    %v670 = vpack.c.bf16 %v478, %v470
    %v671 = vpack.c.bf16 %v479, %v471
    %v672 = vpack.c.bf16 %v480, %v472
    %v673 = vpack.c.bf16 %v481, %v473
    %v674 = vpack.c.bf16 %v482, %v474
    %v675 = vpack.c.bf16 %v483, %v475
    %v676 = vpack.c.bf16 %v492, %v484
    %v677 = vpack.c.bf16 %v493, %v485
    %v678 = vpack.c.bf16 %v494, %v486
    %v679 = vpack.c.bf16 %v495, %v487
    %v680 = vpack.c.bf16 %v496, %v488
    %v681 = vpack.c.bf16 %v497, %v489
    %v682 = vpack.c.bf16 %v498, %v490
    %v683 = vpack.c.bf16 %v499, %v491
    %v684 = vpack.c.bf16 %v508, %v500
    %v685 = vpack.c.bf16 %v509, %v501
    %v686 = vpack.c.bf16 %v510, %v502
    %v687 = vpack.c.bf16 %v511, %v503
    %v688 = vpack.c.bf16 %v512, %v504
    %v689 = vpack.c.bf16 %v513, %v505
    %v690 = vpack.c.bf16 %v514, %v506
    %v691 = vpack.c.bf16 %v515, %v507
    %v692 = vpack.c.bf16 %v524, %v516
    %v693 = vpack.c.bf16 %v525, %v517
    %v694 = vpack.c.bf16 %v526, %v518
    %v695 = vpack.c.bf16 %v527, %v519
    %v696 = vpack.c.bf16 %v528, %v520
    %v697 = vpack.c.bf16 %v529, %v521
    %v698 = vpack.c.bf16 %v530, %v522
    %v699 = vpack.c.bf16 %v531, %v523
    %v700 = vpack.c.bf16 %v540, %v532
    %v701 = vpack.c.bf16 %v541, %v533
    %v702 = vpack.c.bf16 %v542, %v534
    %v703 = vpack.c.bf16 %v543, %v535
    %v704 = vpack.c.bf16 %v544, %v536
    %v705 = vpack.c.bf16 %v545, %v537
    %v706 = vpack.c.bf16 %v546, %v538
    %v707 = vpack.c.bf16 %v547, %v539
    %v708 = vpack.c.bf16 %v556, %v548
    %v709 = vpack.c.bf16 %v557, %v549
    %v710 = vpack.c.bf16 %v558, %v550
    %v711 = vpack.c.bf16 %v559, %v551
    %v712 = vpack.c.bf16 %v560, %v552
    %v713 = vpack.c.bf16 %v561, %v553
    %v714 = vpack.c.bf16 %v562, %v554
    %v715 = vpack.c.bf16 %v563, %v555
    %v716 = vpack.c.bf16 %v572, %v564
    %v717 = vpack.c.bf16 %v573, %v565
    %v718 = vpack.c.bf16 %v574, %v566
    %v719 = vpack.c.bf16 %v575, %v567
    %v720 = vpack.c.bf16 %v576, %v568
    %v721 = vpack.c.bf16 %v577, %v569
    %v722 = vpack.c.bf16 %v578, %v570
    %v723 = vpack.c.bf16 %v579, %v571
    %v724 = vpack.c.bf16 %v588, %v580
    %v725 = vpack.c.bf16 %v589, %v581
    %v726 = vpack.c.bf16 %v590, %v582
    %v727 = vpack.c.bf16 %v591, %v583
    %v728 = vpack.c.bf16 %v592, %v584
    %v729 = vpack.c.bf16 %v593, %v585
    %v730 = vpack.c.bf16 %v594, %v586
    %v731 = vpack.c.bf16 %v595, %v587
    %v732 = vpack.c.bf16 %v604, %v596
    %v733 = vpack.c.bf16 %v605, %v597
    %v734 = vpack.c.bf16 %v606, %v598
    %v735 = vpack.c.bf16 %v607, %v599
    %v736 = vpack.c.bf16 %v608, %v600
    %v737 = vpack.c.bf16 %v609, %v601
    %v738 = vpack.c.bf16 %v610, %v602
    %v739 = vpack.c.bf16 %v611, %v603
    %v740 = vld [vmem:[%s3] sm:$0xff]
    %v741 = vld [vmem:[%s0] sm:$0xf]
    %743 = vst [vmem:[#allocation1] ss:$4 sm:$0xff] %v741
    %v744 = vld.sshfl [vmem:[#allocation1] sm:$0xff pattern:$0x73625140]
    %v745 = vld.sshfl [vmem:[#allocation1 + $0x8] sm:$0xff pattern:$0x73625140]
    %748 = vmatpush.bf16.msra.mxu0 %v668
    %749 = vmatpush.bf16.msra.mxu0 %v660
    %750 = vmatpush.bf16.msra.mxu0 %v652
    %751 = vmatpush.bf16.msra.mxu0 %v644
    %752 = vmatpush.bf16.msra.mxu0 %v636
    %753 = vmatpush.bf16.msra.mxu0 %v628
    %754 = vmatpush.bf16.msra.mxu0 %v620
    %755 = vmatpush.bf16.msra.mxu0 %v612
    %756 = vmatmul.bf16.gmra.mxu0 %v744
    %v757 = vpop.f32.mrf.mxu0
    %v758 = vadd.f32 0.0, %v757
    %v759 = vpop.f32.mrf.mxu0
    %760 = vdwg.mxu0
    %761 = vmatpush.bf16.msra.mxu0 %v732
    %762 = vmatpush.bf16.msra.mxu0 %v724
    %763 = vmatpush.bf16.msra.mxu0 %v716
    %764 = vmatpush.bf16.msra.mxu0 %v708
    %765 = vmatpush.bf16.msra.mxu0 %v700
    %766 = vmatpush.bf16.msra.mxu0 %v692
    %767 = vmatpush.bf16.msra.mxu0 %v684
    %768 = vmatpush.bf16.msra.mxu0 %v676
    %769 = vmatmul.bf16.gmra.mxu0 %v745
    %v770 = vpop.f32.mrf.mxu0
    %v771 = vadd.f32 %v758, %v770
    %v772 = vpop.f32.mrf.mxu0
    %773 = vdwg.mxu0
    %774 = vmatpush.bf16.msra.mxu0 %v669
    %775 = vmatpush.bf16.msra.mxu0 %v661
    %776 = vmatpush.bf16.msra.mxu0 %v653
    %777 = vmatpush.bf16.msra.mxu0 %v645
    %778 = vmatpush.bf16.msra.mxu0 %v637
    %779 = vmatpush.bf16.msra.mxu0 %v629
    %780 = vmatpush.bf16.msra.mxu0 %v621
    %781 = vmatpush.bf16.msra.mxu0 %v613
    %782 = vmatmul.bf16.gmra.mxu0 %v744
    %v783 = vpop.f32.mrf.mxu0
    %v784 = vadd.f32 0.0, %v783
    %v785 = vpop.f32.mrf.mxu0
    %786 = vdwg.mxu0
    %787 = vmatpush.bf16.msra.mxu0 %v733
    %788 = vmatpush.bf16.msra.mxu0 %v725
    %789 = vmatpush.bf16.msra.mxu0 %v717
    %790 = vmatpush.bf16.msra.mxu0 %v709
    %791 = vmatpush.bf16.msra.mxu0 %v701
    %792 = vmatpush.bf16.msra.mxu0 %v693
    %793 = vmatpush.bf16.msra.mxu0 %v685
    %794 = vmatpush.bf16.msra.mxu0 %v677
    %795 = vmatmul.bf16.gmra.mxu0 %v745
    %v796 = vpop.f32.mrf.mxu0
    %v797 = vadd.f32 %v784, %v796
    %v798 = vpop.f32.mrf.mxu0
    %799 = vdwg.mxu0
    %800 = vmatpush.bf16.msra.mxu0 %v670
    %801 = vmatpush.bf16.msra.mxu0 %v662
    %802 = vmatpush.bf16.msra.mxu0 %v654
    %803 = vmatpush.bf16.msra.mxu0 %v646
    %804 = vmatpush.bf16.msra.mxu0 %v638
    %805 = vmatpush.bf16.msra.mxu0 %v630
    %806 = vmatpush.bf16.msra.mxu0 %v622
    %807 = vmatpush.bf16.msra.mxu0 %v614
    %808 = vmatmul.bf16.gmra.mxu0 %v744
    %v809 = vpop.f32.mrf.mxu0
    %v810 = vadd.f32 0.0, %v809
    %v811 = vpop.f32.mrf.mxu0
    %812 = vdwg.mxu0
    %813 = vmatpush.bf16.msra.mxu0 %v734
    %814 = vmatpush.bf16.msra.mxu0 %v726
    %815 = vmatpush.bf16.msra.mxu0 %v718
    %816 = vmatpush.bf16.msra.mxu0 %v710
    %817 = vmatpush.bf16.msra.mxu0 %v702
    %818 = vmatpush.bf16.msra.mxu0 %v694
    %819 = vmatpush.bf16.msra.mxu0 %v686
    %820 = vmatpush.bf16.msra.mxu0 %v678
    %821 = vmatmul.bf16.gmra.mxu0 %v745
    %v822 = vpop.f32.mrf.mxu0
    %v823 = vadd.f32 %v810, %v822
    %v824 = vpop.f32.mrf.mxu0
    %825 = vdwg.mxu0
    %826 = vmatpush.bf16.msra.mxu0 %v671
    %827 = vmatpush.bf16.msra.mxu0 %v663
    %828 = vmatpush.bf16.msra.mxu0 %v655
    %829 = vmatpush.bf16.msra.mxu0 %v647
    %830 = vmatpush.bf16.msra.mxu0 %v639
    %831 = vmatpush.bf16.msra.mxu0 %v631
    %832 = vmatpush.bf16.msra.mxu0 %v623
    %833 = vmatpush.bf16.msra.mxu0 %v615
    %834 = vmatmul.bf16.gmra.mxu0 %v744
    %v835 = vpop.f32.mrf.mxu0
    %v836 = vadd.f32 0.0, %v835
    %v837 = vpop.f32.mrf.mxu0
    %838 = vdwg.mxu0
    %839 = vmatpush.bf16.msra.mxu0 %v735
    %840 = vmatpush.bf16.msra.mxu0 %v727
    %841 = vmatpush.bf16.msra.mxu0 %v719
    %842 = vmatpush.bf16.msra.mxu0 %v711
    %843 = vmatpush.bf16.msra.mxu0 %v703
    %844 = vmatpush.bf16.msra.mxu0 %v695
    %845 = vmatpush.bf16.msra.mxu0 %v687
    %846 = vmatpush.bf16.msra.mxu0 %v679
    %847 = vmatmul.bf16.gmra.mxu0 %v745
    %v848 = vpop.f32.mrf.mxu0
    %v849 = vadd.f32 %v836, %v848
    %v850 = vpop.f32.mrf.mxu0
    %851 = vdwg.mxu0
    %852 = vmatpush.bf16.msra.mxu0 %v672
    %853 = vmatpush.bf16.msra.mxu0 %v664
    %854 = vmatpush.bf16.msra.mxu0 %v656
    %855 = vmatpush.bf16.msra.mxu0 %v648
    %856 = vmatpush.bf16.msra.mxu0 %v640
    %857 = vmatpush.bf16.msra.mxu0 %v632
    %858 = vmatpush.bf16.msra.mxu0 %v624
    %859 = vmatpush.bf16.msra.mxu0 %v616
    %860 = vmatmul.bf16.gmra.mxu0 %v744
    %v861 = vpop.f32.mrf.mxu0
    %v862 = vadd.f32 0.0, %v861
    %v863 = vpop.f32.mrf.mxu0
    %864 = vdwg.mxu0
    %865 = vmatpush.bf16.msra.mxu0 %v736
    %866 = vmatpush.bf16.msra.mxu0 %v728
    %867 = vmatpush.bf16.msra.mxu0 %v720
    %868 = vmatpush.bf16.msra.mxu0 %v712
    %869 = vmatpush.bf16.msra.mxu0 %v704
    %870 = vmatpush.bf16.msra.mxu0 %v696
    %871 = vmatpush.bf16.msra.mxu0 %v688
    %872 = vmatpush.bf16.msra.mxu0 %v680
    %873 = vmatmul.bf16.gmra.mxu0 %v745
    %v874 = vpop.f32.mrf.mxu0
    %v875 = vadd.f32 %v862, %v874
    %v876 = vpop.f32.mrf.mxu0
    %877 = vdwg.mxu0
    %878 = vmatpush.bf16.msra.mxu0 %v673
    %879 = vmatpush.bf16.msra.mxu0 %v665
    %880 = vmatpush.bf16.msra.mxu0 %v657
    %881 = vmatpush.bf16.msra.mxu0 %v649
    %882 = vmatpush.bf16.msra.mxu0 %v641
    %883 = vmatpush.bf16.msra.mxu0 %v633
    %884 = vmatpush.bf16.msra.mxu0 %v625
    %885 = vmatpush.bf16.msra.mxu0 %v617
    %886 = vmatmul.bf16.gmra.mxu0 %v744
    %v887 = vpop.f32.mrf.mxu0
    %v888 = vadd.f32 0.0, %v887
    %v889 = vpop.f32.mrf.mxu0
    %890 = vdwg.mxu0
    %891 = vmatpush.bf16.msra.mxu0 %v737
    %892 = vmatpush.bf16.msra.mxu0 %v729
    %893 = vmatpush.bf16.msra.mxu0 %v721
    %894 = vmatpush.bf16.msra.mxu0 %v713
    %895 = vmatpush.bf16.msra.mxu0 %v705
    %896 = vmatpush.bf16.msra.mxu0 %v697
    %897 = vmatpush.bf16.msra.mxu0 %v689
    %898 = vmatpush.bf16.msra.mxu0 %v681
    %899 = vmatmul.bf16.gmra.mxu0 %v745
    %v900 = vpop.f32.mrf.mxu0
    %v901 = vadd.f32 %v888, %v900
    %v902 = vpop.f32.mrf.mxu0
    %903 = vdwg.mxu0
    %904 = vmatpush.bf16.msra.mxu0 %v674
    %905 = vmatpush.bf16.msra.mxu0 %v666
    %906 = vmatpush.bf16.msra.mxu0 %v658
    %907 = vmatpush.bf16.msra.mxu0 %v650
    %908 = vmatpush.bf16.msra.mxu0 %v642
    %909 = vmatpush.bf16.msra.mxu0 %v634
    %910 = vmatpush.bf16.msra.mxu0 %v626
    %911 = vmatpush.bf16.msra.mxu0 %v618
    %912 = vmatmul.bf16.gmra.mxu0 %v744
    %v913 = vpop.f32.mrf.mxu0
    %v914 = vadd.f32 0.0, %v913
    %v915 = vpop.f32.mrf.mxu0
    %916 = vdwg.mxu0
    %917 = vmatpush.bf16.msra.mxu0 %v738
    %918 = vmatpush.bf16.msra.mxu0 %v730
    %919 = vmatpush.bf16.msra.mxu0 %v722
    %920 = vmatpush.bf16.msra.mxu0 %v714
    %921 = vmatpush.bf16.msra.mxu0 %v706
    %922 = vmatpush.bf16.msra.mxu0 %v698
    %923 = vmatpush.bf16.msra.mxu0 %v690
    %924 = vmatpush.bf16.msra.mxu0 %v682
    %925 = vmatmul.bf16.gmra.mxu0 %v745
    %v926 = vpop.f32.mrf.mxu0
    %v927 = vadd.f32 %v914, %v926
    %v928 = vpop.f32.mrf.mxu0
    %929 = vdwg.mxu0
    %930 = vmatpush.bf16.msra.mxu0 %v675
    %931 = vmatpush.bf16.msra.mxu0 %v667
    %932 = vmatpush.bf16.msra.mxu0 %v659
    %933 = vmatpush.bf16.msra.mxu0 %v651
    %934 = vmatpush.bf16.msra.mxu0 %v643
    %935 = vmatpush.bf16.msra.mxu0 %v635
    %936 = vmatpush.bf16.msra.mxu0 %v627
    %937 = vmatpush.bf16.msra.mxu0 %v619
    %938 = vmatmul.bf16.gmra.mxu0 %v744
    %v939 = vpop.f32.mrf.mxu0
    %v940 = vadd.f32 0.0, %v939
    %v941 = vpop.f32.mrf.mxu0
    %942 = vdwg.mxu0
    %943 = vmatpush.bf16.msra.mxu0 %v739
    %944 = vmatpush.bf16.msra.mxu0 %v731
    %945 = vmatpush.bf16.msra.mxu0 %v723
    %946 = vmatpush.bf16.msra.mxu0 %v715
    %947 = vmatpush.bf16.msra.mxu0 %v707
    %948 = vmatpush.bf16.msra.mxu0 %v699
    %949 = vmatpush.bf16.msra.mxu0 %v691
    %950 = vmatpush.bf16.msra.mxu0 %v683
    %951 = vmatmul.bf16.gmra.mxu0 %v745
    %v952 = vpop.f32.mrf.mxu0
    %v953 = vadd.f32 %v940, %v952
    %v954 = vpop.f32.mrf.mxu0
    %955 = vdwg.mxu0
    %v957 = vperm.slane %v740, 0
    %v958 = vperm.slane %v740, 1
    %v959 = vperm.slane %v740, 2
    %v960 = vperm.slane %v740, 3
    %v961 = vperm.slane %v740, 4
    %v962 = vperm.slane %v740, 5
    %v963 = vperm.slane %v740, 6
    %v964 = vperm.slane %v740, 7
    %v973 = vmul.f32 %v771, %v957
    %v974 = vmul.f32 %v797, %v958
    %v975 = vmul.f32 %v823, %v959
    %v976 = vmul.f32 %v849, %v960
    %v977 = vmul.f32 %v875, %v961
    %v978 = vmul.f32 %v901, %v962
    %v979 = vmul.f32 %v927, %v963
    %v980 = vmul.f32 %v953, %v964
    %v989 = vrot.slane %v974, 4
    %v990 = vrot.slane %v976, 4
    %v991 = vrot.slane %v978, 4
    %v992 = vrot.slane %v980, 4
    %vm993 = vcmask 1043456
    %v994 = vsel %vm993, %v973, %v989
    %v995 = vsel %vm993, %v975, %v990
    %v996 = vsel %vm993, %v977, %v991
    %v997 = vsel %vm993, %v979, %v992
    %1002 = vst [vmem:[#allocation5] sm:$0xff] %v994
    %1003 = vst [vmem:[#allocation5 + $0x8] sm:$0xff] %v995
    %1004 = vst [vmem:[#allocation5 + $0x10] sm:$0xff] %v996
    %1005 = vst [vmem:[#allocation5 + $0x18] sm:$0xff] %v997
    %v1006 = vld [vmem:[%s1] sm:$0xff]
    %v1007 = vld [vmem:[%s1 + $0x8] sm:$0x33]
    %v1010 = vunpack.c.l.b16 %v1006
    %v1011 = vunpack.c.h.b16 %v1006
    %v1012 = vunpack.c.l.b16 %v1007
    %v1013 = vunpack.c.h.b16 %v1007
    %v1014 = vpack.c.b16 %v1012, %v1010
    %v1015 = vpack.c.b16 %v1013, %v1011
    %1018 = vmatpush.bf16.msra.mxu0 %v668
    %1019 = vmatpush.bf16.msra.mxu0 %v660
    %1020 = vmatpush.bf16.msra.mxu0 %v652
    %1021 = vmatpush.bf16.msra.mxu0 %v644
    %1022 = vmatpush.bf16.msra.mxu0 %v636
    %1023 = vmatpush.bf16.msra.mxu0 %v628
    %1024 = vmatpush.bf16.msra.mxu0 %v620
    %1025 = vmatpush.bf16.msra.mxu0 %v612
    %1026 = vmatmul.bf16.gmra.mxu0 %v1014
    %v1027 = vpop.f32.mrf.mxu0
    %v1028 = vadd.f32 0.0, %v1027
    %v1029 = vpop.f32.mrf.mxu0
    %v1030 = vadd.f32 0.0, %v1029
    %1031 = vdwg.mxu0
    %1032 = vmatpush.bf16.msra.mxu0 %v732
    %1033 = vmatpush.bf16.msra.mxu0 %v724
    %1034 = vmatpush.bf16.msra.mxu0 %v716
    %1035 = vmatpush.bf16.msra.mxu0 %v708
    %1036 = vmatpush.bf16.msra.mxu0 %v700
    %1037 = vmatpush.bf16.msra.mxu0 %v692
    %1038 = vmatpush.bf16.msra.mxu0 %v684
    %1039 = vmatpush.bf16.msra.mxu0 %v676
    %1040 = vmatmul.bf16.gmra.mxu0 %v1015
    %v1041 = vpop.f32.mrf.mxu0
    %v1042 = vadd.f32 %v1028, %v1041
    %v1043 = vpop.f32.mrf.mxu0
    %v1044 = vadd.f32 %v1030, %v1043
    %1045 = vdwg.mxu0
    %1046 = vmatpush.bf16.msra.mxu0 %v669
    %1047 = vmatpush.bf16.msra.mxu0 %v661
    %1048 = vmatpush.bf16.msra.mxu0 %v653
    %1049 = vmatpush.bf16.msra.mxu0 %v645
    %1050 = vmatpush.bf16.msra.mxu0 %v637
    %1051 = vmatpush.bf16.msra.mxu0 %v629
    %1052 = vmatpush.bf16.msra.mxu0 %v621
    %1053 = vmatpush.bf16.msra.mxu0 %v613
    %1054 = vmatmul.bf16.gmra.mxu0 %v1014
    %v1055 = vpop.f32.mrf.mxu0
    %v1056 = vadd.f32 0.0, %v1055
    %v1057 = vpop.f32.mrf.mxu0
    %v1058 = vadd.f32 0.0, %v1057
    %1059 = vdwg.mxu0
    %1060 = vmatpush.bf16.msra.mxu0 %v733
    %1061 = vmatpush.bf16.msra.mxu0 %v725
    %1062 = vmatpush.bf16.msra.mxu0 %v717
    %1063 = vmatpush.bf16.msra.mxu0 %v709
    %1064 = vmatpush.bf16.msra.mxu0 %v701
    %1065 = vmatpush.bf16.msra.mxu0 %v693
    %1066 = vmatpush.bf16.msra.mxu0 %v685
    %1067 = vmatpush.bf16.msra.mxu0 %v677
    %1068 = vmatmul.bf16.gmra.mxu0 %v1015
    %v1069 = vpop.f32.mrf.mxu0
    %v1070 = vadd.f32 %v1056, %v1069
    %v1071 = vpop.f32.mrf.mxu0
    %v1072 = vadd.f32 %v1058, %v1071
    %1073 = vdwg.mxu0
    %1074 = vmatpush.bf16.msra.mxu0 %v670
    %1075 = vmatpush.bf16.msra.mxu0 %v662
    %1076 = vmatpush.bf16.msra.mxu0 %v654
    %1077 = vmatpush.bf16.msra.mxu0 %v646
    %1078 = vmatpush.bf16.msra.mxu0 %v638
    %1079 = vmatpush.bf16.msra.mxu0 %v630
    %1080 = vmatpush.bf16.msra.mxu0 %v622
    %1081 = vmatpush.bf16.msra.mxu0 %v614
    %1082 = vmatmul.bf16.gmra.mxu0 %v1014
    %v1083 = vpop.f32.mrf.mxu0
    %v1084 = vadd.f32 0.0, %v1083
    %v1085 = vpop.f32.mrf.mxu0
    %v1086 = vadd.f32 0.0, %v1085
    %1087 = vdwg.mxu0
    %1088 = vmatpush.bf16.msra.mxu0 %v734
    %1089 = vmatpush.bf16.msra.mxu0 %v726
    %1090 = vmatpush.bf16.msra.mxu0 %v718
    %1091 = vmatpush.bf16.msra.mxu0 %v710
    %1092 = vmatpush.bf16.msra.mxu0 %v702
    %1093 = vmatpush.bf16.msra.mxu0 %v694
    %1094 = vmatpush.bf16.msra.mxu0 %v686
    %1095 = vmatpush.bf16.msra.mxu0 %v678
    %1096 = vmatmul.bf16.gmra.mxu0 %v1015
    %v1097 = vpop.f32.mrf.mxu0
    %v1098 = vadd.f32 %v1084, %v1097
    %v1099 = vpop.f32.mrf.mxu0
    %v1100 = vadd.f32 %v1086, %v1099
    %1101 = vdwg.mxu0
    %1102 = vmatpush.bf16.msra.mxu0 %v671
    %1103 = vmatpush.bf16.msra.mxu0 %v663
    %1104 = vmatpush.bf16.msra.mxu0 %v655
    %1105 = vmatpush.bf16.msra.mxu0 %v647
    %1106 = vmatpush.bf16.msra.mxu0 %v639
    %1107 = vmatpush.bf16.msra.mxu0 %v631
    %1108 = vmatpush.bf16.msra.mxu0 %v623
    %1109 = vmatpush.bf16.msra.mxu0 %v615
    %1110 = vmatmul.bf16.gmra.mxu0 %v1014
    %v1111 = vpop.f32.mrf.mxu0
    %v1112 = vadd.f32 0.0, %v1111
    %v1113 = vpop.f32.mrf.mxu0
    %v1114 = vadd.f32 0.0, %v1113
    %1115 = vdwg.mxu0
    %1116 = vmatpush.bf16.msra.mxu0 %v735
    %1117 = vmatpush.bf16.msra.mxu0 %v727
    %1118 = vmatpush.bf16.msra.mxu0 %v719
    %1119 = vmatpush.bf16.msra.mxu0 %v711
    %1120 = vmatpush.bf16.msra.mxu0 %v703
    %1121 = vmatpush.bf16.msra.mxu0 %v695
    %1122 = vmatpush.bf16.msra.mxu0 %v687
    %1123 = vmatpush.bf16.msra.mxu0 %v679
    %1124 = vmatmul.bf16.gmra.mxu0 %v1015
    %v1125 = vpop.f32.mrf.mxu0
    %v1126 = vadd.f32 %v1112, %v1125
    %v1127 = vpop.f32.mrf.mxu0
    %v1128 = vadd.f32 %v1114, %v1127
    %1129 = vdwg.mxu0
    %1130 = vmatpush.bf16.msra.mxu0 %v672
    %1131 = vmatpush.bf16.msra.mxu0 %v664
    %1132 = vmatpush.bf16.msra.mxu0 %v656
    %1133 = vmatpush.bf16.msra.mxu0 %v648
    %1134 = vmatpush.bf16.msra.mxu0 %v640
    %1135 = vmatpush.bf16.msra.mxu0 %v632
    %1136 = vmatpush.bf16.msra.mxu0 %v624
    %1137 = vmatpush.bf16.msra.mxu0 %v616
    %1138 = vmatmul.bf16.gmra.mxu0 %v1014
    %v1139 = vpop.f32.mrf.mxu0
    %v1140 = vadd.f32 0.0, %v1139
    %v1141 = vpop.f32.mrf.mxu0
    %v1142 = vadd.f32 0.0, %v1141
    %1143 = vdwg.mxu0
    %1144 = vmatpush.bf16.msra.mxu0 %v736
    %1145 = vmatpush.bf16.msra.mxu0 %v728
    %1146 = vmatpush.bf16.msra.mxu0 %v720
    %1147 = vmatpush.bf16.msra.mxu0 %v712
    %1148 = vmatpush.bf16.msra.mxu0 %v704
    %1149 = vmatpush.bf16.msra.mxu0 %v696
    %1150 = vmatpush.bf16.msra.mxu0 %v688
    %1151 = vmatpush.bf16.msra.mxu0 %v680
    %1152 = vmatmul.bf16.gmra.mxu0 %v1015
    %v1153 = vpop.f32.mrf.mxu0
    %v1154 = vadd.f32 %v1140, %v1153
    %v1155 = vpop.f32.mrf.mxu0
    %v1156 = vadd.f32 %v1142, %v1155
    %1157 = vdwg.mxu0
    %1158 = vmatpush.bf16.msra.mxu0 %v673
    %1159 = vmatpush.bf16.msra.mxu0 %v665
    %1160 = vmatpush.bf16.msra.mxu0 %v657
    %1161 = vmatpush.bf16.msra.mxu0 %v649
    %1162 = vmatpush.bf16.msra.mxu0 %v641
    %1163 = vmatpush.bf16.msra.mxu0 %v633
    %1164 = vmatpush.bf16.msra.mxu0 %v625
    %1165 = vmatpush.bf16.msra.mxu0 %v617
    %1166 = vmatmul.bf16.gmra.mxu0 %v1014
    %v1167 = vpop.f32.mrf.mxu0
    %v1168 = vadd.f32 0.0, %v1167
    %v1169 = vpop.f32.mrf.mxu0
    %v1170 = vadd.f32 0.0, %v1169
    %1171 = vdwg.mxu0
    %1172 = vmatpush.bf16.msra.mxu0 %v737
    %1173 = vmatpush.bf16.msra.mxu0 %v729
    %1174 = vmatpush.bf16.msra.mxu0 %v721
    %1175 = vmatpush.bf16.msra.mxu0 %v713
    %1176 = vmatpush.bf16.msra.mxu0 %v705
    %1177 = vmatpush.bf16.msra.mxu0 %v697
    %1178 = vmatpush.bf16.msra.mxu0 %v689
    %1179 = vmatpush.bf16.msra.mxu0 %v681
    %1180 = vmatmul.bf16.gmra.mxu0 %v1015
    %v1181 = vpop.f32.mrf.mxu0
    %v1182 = vadd.f32 %v1168, %v1181
    %v1183 = vpop.f32.mrf.mxu0
    %v1184 = vadd.f32 %v1170, %v1183
    %1185 = vdwg.mxu0
    %1186 = vmatpush.bf16.msra.mxu0 %v674
    %1187 = vmatpush.bf16.msra.mxu0 %v666
    %1188 = vmatpush.bf16.msra.mxu0 %v658
    %1189 = vmatpush.bf16.msra.mxu0 %v650
    %1190 = vmatpush.bf16.msra.mxu0 %v642
    %1191 = vmatpush.bf16.msra.mxu0 %v634
    %1192 = vmatpush.bf16.msra.mxu0 %v626
    %1193 = vmatpush.bf16.msra.mxu0 %v618
    %1194 = vmatmul.bf16.gmra.mxu0 %v1014
    %v1195 = vpop.f32.mrf.mxu0
    %v1196 = vadd.f32 0.0, %v1195
    %v1197 = vpop.f32.mrf.mxu0
    %v1198 = vadd.f32 0.0, %v1197
    %1199 = vdwg.mxu0
    %1200 = vmatpush.bf16.msra.mxu0 %v738
    %1201 = vmatpush.bf16.msra.mxu0 %v730
    %1202 = vmatpush.bf16.msra.mxu0 %v722
    %1203 = vmatpush.bf16.msra.mxu0 %v714
    %1204 = vmatpush.bf16.msra.mxu0 %v706
    %1205 = vmatpush.bf16.msra.mxu0 %v698
    %1206 = vmatpush.bf16.msra.mxu0 %v690
    %1207 = vmatpush.bf16.msra.mxu0 %v682
    %1208 = vmatmul.bf16.gmra.mxu0 %v1015
    %v1209 = vpop.f32.mrf.mxu0
    %v1210 = vadd.f32 %v1196, %v1209
    %v1211 = vpop.f32.mrf.mxu0
    %v1212 = vadd.f32 %v1198, %v1211
    %1213 = vdwg.mxu0
    %1214 = vmatpush.bf16.msra.mxu0 %v675
    %1215 = vmatpush.bf16.msra.mxu0 %v667
    %1216 = vmatpush.bf16.msra.mxu0 %v659
    %1217 = vmatpush.bf16.msra.mxu0 %v651
    %1218 = vmatpush.bf16.msra.mxu0 %v643
    %1219 = vmatpush.bf16.msra.mxu0 %v635
    %1220 = vmatpush.bf16.msra.mxu0 %v627
    %1221 = vmatpush.bf16.msra.mxu0 %v619
    %1222 = vmatmul.bf16.gmra.mxu0 %v1014
    %v1223 = vpop.f32.mrf.mxu0
    %v1224 = vadd.f32 0.0, %v1223
    %v1225 = vpop.f32.mrf.mxu0
    %v1226 = vadd.f32 0.0, %v1225
    %1227 = vdwg.mxu0
    %1228 = vmatpush.bf16.msra.mxu0 %v739
    %1229 = vmatpush.bf16.msra.mxu0 %v731
    %1230 = vmatpush.bf16.msra.mxu0 %v723
    %1231 = vmatpush.bf16.msra.mxu0 %v715
    %1232 = vmatpush.bf16.msra.mxu0 %v707
    %1233 = vmatpush.bf16.msra.mxu0 %v699
    %1234 = vmatpush.bf16.msra.mxu0 %v691
    %1235 = vmatpush.bf16.msra.mxu0 %v683
    %1236 = vmatmul.bf16.gmra.mxu0 %v1015
    %v1237 = vpop.f32.mrf.mxu0
    %v1238 = vadd.f32 %v1224, %v1237
    %v1239 = vpop.f32.mrf.mxu0
    %v1240 = vadd.f32 %v1226, %v1239
    %1241 = vdwg.mxu0
    %v1242 = vmul.f32 %v1042, %v957
    %v1243 = vmul.f32 %v1070, %v958
    %v1244 = vmul.f32 %v1098, %v959
    %v1245 = vmul.f32 %v1126, %v960
    %v1246 = vmul.f32 %v1154, %v961
    %v1247 = vmul.f32 %v1182, %v962
    %v1248 = vmul.f32 %v1210, %v963
    %v1249 = vmul.f32 %v1238, %v964
    %v1250 = vmul.f32 %v1044, %v957
    %v1251 = vmul.f32 %v1072, %v958
    %v1252 = vmul.f32 %v1100, %v959
    %v1253 = vmul.f32 %v1128, %v960
    %v1254 = vmul.f32 %v1156, %v961
    %v1255 = vmul.f32 %v1184, %v962
    %v1256 = vmul.f32 %v1212, %v963
    %v1257 = vmul.f32 %v1240, %v964
    %1258 = vst [vmem:[%s5] sm:$0xff] %v1242
    %1259 = vst [vmem:[%s5 + $0x8] sm:$0xff] %v1243
    %1260 = vst [vmem:[%s5 + $0x10] sm:$0xff] %v1244
    %1261 = vst [vmem:[%s5 + $0x18] sm:$0xff] %v1245
    %1262 = vst [vmem:[%s5 + $0x20] sm:$0xff] %v1246
    %1263 = vst [vmem:[%s5 + $0x28] sm:$0xff] %v1247
    %1264 = vst [vmem:[%s5 + $0x30] sm:$0xff] %v1248
    %1265 = vst [vmem:[%s5 + $0x38] sm:$0xff] %v1249
    %1266 = vst [vmem:[%s5 + $0x40] sm:$0xf] %v1250
    %1267 = vst [vmem:[%s5 + $0x48] sm:$0xf] %v1251
    %1268 = vst [vmem:[%s5 + $0x50] sm:$0xf] %v1252
    %1269 = vst [vmem:[%s5 + $0x58] sm:$0xf] %v1253
    %1270 = vst [vmem:[%s5 + $0x60] sm:$0xf] %v1254
    %1271 = vst [vmem:[%s5 + $0x68] sm:$0xf] %v1255
    %1272 = vst [vmem:[%s5 + $0x70] sm:$0xf] %v1256
    %1273 = vst [vmem:[%s5 + $0x78] sm:$0xf] %v1257
    // Predicated region
    $region22: #{medusa_model_forward.3} parent=1 // pred_check
      _
    $region23: #{medusa_model_forward.3} parent=1 // pred_check_branch
      %1275 = sbr.rel (0) target = $region25
    $region24: #{medusa_model_forward.3} parent=1 // pred_region
      %1277 = vsyncadd [#allocation4], 0
      %s1279 = sshll.u32 [#allocation5], 4
      %s1280 = int_to_ptr.vmem [resolvable:$true] %s1279
      %s1281 = sshll.u32 %s4, 4
      %s1282 = int_to_ptr.hbm [resolvable:$true] %s1281
      %1284 = dma.vmem_to_hbm [thread:$0]  %s1280, 512, %s1282, [#allocation4]
    $region25: #{medusa_model_forward.3} parent=1 // pred_fallthru
      _
    // Predicated region
    $region26: #{medusa_model_forward.3} parent=1 // pred_check
      _
    $region27: #{medusa_model_forward.3} parent=1 // pred_check_branch
      %1286 = sbr.rel (0) target = $region29
    $region28: #{medusa_model_forward.3} parent=1 // pred_region
      _
    $region29: #{medusa_model_forward.3} parent=1 // pred_fallthru
      _
    // Predicated region
    $region30: #{medusa_model_forward.3} parent=1 // pred_check
      _
    $region31: #{medusa_model_forward.3} parent=1 // pred_check_branch
      %1288 = sbr.rel (0) target = $region33
    $region32: #{medusa_model_forward.3} parent=1 // pred_region
      %1290 = dma.done [#allocation4], 512
    $region33: #{medusa_model_forward.3} parent=1 // pred_fallthru
      _
    // Predicated region
    $region34: #{medusa_model_forward.3} parent=1 // pred_check
      _
    $region35: #{medusa_model_forward.3} parent=1 // pred_check_branch
      %1292 = sbr.rel (0) target = $region37
    $region36: #{medusa_model_forward.3} parent=1 // pred_region
      _
    $region37: #{medusa_model_forward.3} parent=1 // pred_fallthru
      _
    %1293 = vsyncpa [#allocation3], 1
    %1294 = vsyncpa [#allocation4], 1

</llo_original>
